<compile_context>
chip_gen: v7x
topology: tpu7x:2x2x1
jax: 0.10.0
libtpu: 0.0.40
codegen_flags: <defaults>
</compile_context>

<pallas_src>
import math

import jax
import jax.numpy as jnp
import numpy as np
from jax.experimental import pallas as pl
from jax.experimental.pallas import tpu as pltpu


# --------------------------------------------------------------------------
# Kernels
# --------------------------------------------------------------------------
def _make_single_pass_kernel(S, H, NH, DH):
    """Whole-sequence-resident kernel: one grid step per batch element."""
    scale = 1.0 / math.sqrt(DH)

    def kernel(x_ref, wq_ref, bq_ref, wk_ref, bk_ref, wqa_ref, bqa_ref,
               wt_ref, bt_ref, e_ref, et_ref, out_ref):
        x16 = x_ref[0]                 # (S, H) bf16
        et = et_ref[...]               # (NH, H) f32 one-hot (head -> flat hidden)

        # projections (bf16 MXU operands, f32 accumulation)
        mq = jnp.dot(x16, wq_ref[...], preferred_element_type=jnp.float32) + bq_ref[...]
        mk = jnp.dot(x16, wk_ref[...], preferred_element_type=jnp.float32) + bk_ref[...]
        mq16 = mq.astype(jnp.bfloat16)
        mk16 = mk.astype(jnp.bfloat16)

        # ---- query-attention softmax over S -> pooled query (S-contraction) ----
        qs = (jnp.dot(mq16, wqa_ref[...], preferred_element_type=jnp.float32)
              + bqa_ref[...])                                  # (S, NH); 1/sqrt(DH) pre-folded
        qs = qs - jnp.max(qs, axis=0, keepdims=True)
        qw = jnp.exp(qs)
        inv_lq = pl.reciprocal(jnp.sum(qw, axis=0, keepdims=True), approx=True)   # (1, NH)
        accq = jax.lax.dot_general(                            # (NH, H): contract over S
            qw.astype(jnp.bfloat16), mq16,
            dimension_numbers=(((0,), (0,)), ((), ())),
            preferred_element_type=jnp.float32)
        inv_lq_h = jnp.dot(inv_lq, et, preferred_element_type=jnp.float32)        # (1, H)
        # second 1/sqrt(DH) applied once to the pooled query (not to (S,NH) logits)
        pq = jnp.sum(accq * et, axis=0, keepdims=True) * inv_lq_h * scale          # (1, H)

        # ---- query-key softmax over S -> pooled key ----
        qks = jnp.dot((mk * pq).astype(jnp.bfloat16), e_ref[...],
                      preferred_element_type=jnp.float32)      # (S, NH)
        qks = qks - jnp.max(qks, axis=0, keepdims=True)
        qkw = jnp.exp(qks)
        inv_lk = pl.reciprocal(jnp.sum(qkw, axis=0, keepdims=True), approx=True)
        acck = jax.lax.dot_general(
            qkw.astype(jnp.bfloat16), mk16,
            dimension_numbers=(((0,), (0,)), ((), ())),
            preferred_element_type=jnp.float32)                # (NH, H)
        inv_lk_h = jnp.dot(inv_lk, et, preferred_element_type=jnp.float32)
        pk = jnp.sum(acck * et, axis=0, keepdims=True) * inv_lk_h                  # (1, H)

        # ---- weighted value + output transform + residual ----
        wv16 = (pk * mq).astype(jnp.bfloat16)
        out = (jnp.dot(wv16, wt_ref[...], preferred_element_type=jnp.float32)
               + bt_ref[...] + mq)
        out_ref[0] = out.astype(out_ref.dtype)

    return kernel


def _make_tiled_kernel(TS, H, NH, DH):
    """Sequence-tiled 3-pass kernel with online (running max/sum) softmax.

    grid = (B, 3, S // TS):
      pass 0: accumulate pooled query, pass 1: pooled key, pass 2: output.
    """
    scale = 1.0 / math.sqrt(DH)

    def kernel(x_ref, wq_ref, bq_ref, wk_ref, bk_ref, wqa_ref, bqa_ref,
               wt_ref, bt_ref, e_ref, et_ref, out_ref,
               m_s, l_s, acc_s, pq_s, pk_s):
        p = pl.program_id(1)
        s = pl.program_id(2)
        last = pl.num_programs(2) - 1

        x16 = x_ref[0]                 # (TS, H) bf16
        et = et_ref[...]               # (NH, H) f32 one-hot

        # reset the running-softmax state at the start of each pooling pass
        @pl.when((s == 0) & (p < 2))
        def _():
            m_s[...] = jnp.full_like(m_s, -jnp.inf)
            l_s[...] = jnp.zeros_like(l_s)
            acc_s[...] = jnp.zeros_like(acc_s)

        def online_step(logits, feats16):
            # logits: (TS, NH) f32, feats16: (TS, H) bf16
            m_old = m_s[...]
            m_new = jnp.maximum(m_old, jnp.max(logits, axis=0, keepdims=True))
            alpha = jnp.exp(m_old - m_new)                     # (1, NH), f32
            pw = jnp.exp(logits - m_new)                       # (TS, NH)
            l_s[...] = alpha * l_s[...] + jnp.sum(pw, axis=0, keepdims=True)
            # exact per-column rescale: et columns are one-hot, so
            # alpha_h[h] == alpha[head(h)]   (f32, tiny matmul)
            alpha_h = jnp.dot(alpha, et, preferred_element_type=jnp.float32)  # (1, H)
            contrib = jax.lax.dot_general(                     # (NH, H): contract over TS
                pw.astype(jnp.bfloat16), feats16,
                dimension_numbers=(((0,), (0,)), ((), ())),
                preferred_element_type=jnp.float32)
            acc_s[...] = alpha_h * acc_s[...] + contrib
            m_s[...] = m_new

        def pooled_flat():
            # collapse the (NH, H) accumulator to the flat (1, H) pooled vector
            inv_l = pl.reciprocal(l_s[...], approx=True)                       # (1, NH)
            inv_l_h = jnp.dot(inv_l, et, preferred_element_type=jnp.float32)   # (1, H)
            return jnp.sum(acc_s[...] * et, axis=0, keepdims=True) * inv_l_h

        # ---- pass 0: query-attention softmax over S -> pooled query ----
        @pl.when(p == 0)
        def _():
            mq = (jnp.dot(x16, wq_ref[...], preferred_element_type=jnp.float32)
                  + bq_ref[...])
            mq16 = mq.astype(jnp.bfloat16)
            logits = (jnp.dot(mq16, wqa_ref[...], preferred_element_type=jnp.float32)
                      + bqa_ref[...])                          # 1/sqrt(DH) pre-folded
            online_step(logits, mq16)

            @pl.when(s == last)
            def _():
                pq_s[...] = pooled_flat() * scale              # second 1/sqrt(DH) here

        # ---- pass 1: query-key softmax over S -> pooled key ----
        @pl.when(p == 1)
        def _():
            mk = (jnp.dot(x16, wk_ref[...], preferred_element_type=jnp.float32)
                  + bk_ref[...])
            mk16 = mk.astype(jnp.bfloat16)
            logits = jnp.dot((mk * pq_s[...]).astype(jnp.bfloat16), e_ref[...],
                             preferred_element_type=jnp.float32)
            online_step(logits, mk16)

            @pl.when(s == last)
            def _():
                pk_s[...] = pooled_flat()

        # ---- pass 2: weighted value + output transform + residual ----
        @pl.when(p == 2)
        def _():
            mq = (jnp.dot(x16, wq_ref[...], preferred_element_type=jnp.float32)
                  + bq_ref[...])
            wv16 = (pk_s[...] * mq).astype(jnp.bfloat16)
            out = (jnp.dot(wv16, wt_ref[...], preferred_element_type=jnp.float32)
                   + bt_ref[...] + mq)
            out_ref[0] = out.astype(out_ref.dtype)

    return kernel


# --------------------------------------------------------------------------
# Wrapper
# --------------------------------------------------------------------------
def _choose_seq_tile(S, H):
    """Largest sequence tile (multiple of 16, dividing S) whose per-step
    working set stays within ~16 MiB of VMEM; whole S if it already fits."""
    budget = 16 * 1024 * 1024
    per_row = 40 * H                       # ~bytes of VMEM per resident seq row
    max_rows = max(16, budget // per_row)
    if S <= max_rows:
        return S
    ts = (max_rows // 16) * 16
    while ts >= 16:
        if S % ts == 0:
            return ts
        ts -= 16
    return S                               # no usable divisor -> whole sequence


def _vmem_limit_bytes(TS, H, NH):
    """Size the scoped-VMEM limit from the actual per-step footprint."""
    est = (2 * TS * H * 2                                   # x tile (bf16, dbl-buffered)
           + 2 * TS * H * 4                                 # out tile (f32, dbl-buffered)
           + 2 * (3 * H * H * 2 + 2 * H * NH * 2            # wq/wk/wt, wqa/E (bf16)
                  + NH * H * 4 + 4 * H * 4 + 2 * NH * 4)    # ET + biases (f32)
           + 8 * TS * H * 4                                 # in-kernel temporaries
           + NH * H * 4 + 2 * H * 4 + 4 * NH * 4)           # scratch accumulators
    return int(min(64 * 1024 * 1024, max(16 * 1024 * 1024, 2 * est)))


def fast_self_attention(hidden_states, params, num_heads, *, seq_tile=None,
                        out_dtype=jnp.float32):
    """hidden_states: (B, S, H).  params: dict of pre-transposed (in,out) weights.

    Contract with the kernel (documented, per review): 1/sqrt(DH) is folded
    into wqa/bqa HERE, and the second 1/sqrt(DH) is applied once to the pooled
    query INSIDE the kernel.  Do not pre/post-scale these weights elsewhere.
    """
    B, S, H = hidden_states.shape
    NH = num_heads
    if H % NH != 0:
        raise ValueError("hidden size must be a multiple of num_heads")
    DH = H // NH
    scale = 1.0 / math.sqrt(DH)

    # --- host-side parameter / input prep ---
    x16 = hidden_states.astype(jnp.bfloat16)        # halve input HBM bytes
    wq = params["wq"].astype(jnp.bfloat16)          # (H, H)
    bq = params["bq"].astype(jnp.float32).reshape(1, H)
    wk = params["wk"].astype(jnp.bfloat16)          # (H, H)
    bk = params["bk"].astype(jnp.float32).reshape(1, H)
    wqa = (params["wqa"].astype(jnp.float32) * scale).astype(jnp.bfloat16)  # (H, NH)
    bqa = (params["bqa"].astype(jnp.float32) * scale).reshape(1, NH)
    wt = params["wt"].astype(jnp.bfloat16)          # (H, H)
    bt = params["bt"].astype(jnp.float32).reshape(1, H)

    # one-hot head selectors, built once on the host (fetched once; constant index map)
    head_of = np.arange(H) // DH
    e_np = (head_of[:, None] == np.arange(NH)[None, :]).astype(np.float32)  # (H, NH)
    e16 = jnp.asarray(e_np, dtype=jnp.bfloat16)                             # (H, NH)
    etf = jnp.asarray(e_np.T, dtype=jnp.float32)                            # (NH, H)

    TS = int(seq_tile) if seq_tile is not None else _choose_seq_tile(S, H)
    TS = max(1, min(TS, S))
    if S % TS != 0:
        TS = S
    n_tiles = S // TS

    weights = (wq, bq, wk, bk, wqa, bqa, wt, bt, e16, etf)

    flops = int(2 * B * S * H * ((4 if n_tiles > 1 else 3) * H + 4 * NH))
    transcendentals = int(2 * B * S * NH)
    bytes_accessed = int(
        (3 if n_tiles > 1 else 1) * B * S * H * 2            # bf16 input (re-read per pass)
        + B * S * H * jnp.dtype(out_dtype).itemsize          # output
        + 3 * H * H * 2 + 2 * H * NH * 2                     # bf16 weights / selector
        + NH * H * 4 + 4 * H * 4 + NH * 4)                   # f32 selector / biases

    if n_tiles == 1:
        # whole-sequence residency (short S / v5e-v6e VMEM): single fused pass
        rep = lambda b: (0, 0)
        grid = (B,)
        in_specs = ([pl.BlockSpec((1, S, H), lambda b: (b, 0, 0))]
                    + [pl.BlockSpec(w.shape, rep) for w in weights])
        out_specs = pl.BlockSpec((1, S, H), lambda b: (b, 0, 0))
        kernel = _make_single_pass_kernel(S, H, NH, DH)
        scratch = []
        dims = ("parallel",)
    else:
        # long sequences (v7x): 3-pass running-softmax structure over S tiles
        rep = lambda b, p, s: (0, 0)
        grid = (B, 3, n_tiles)
        in_specs = ([pl.BlockSpec((1, TS, H), lambda b, p, s: (b, s, 0))]
                    + [pl.BlockSpec(w.shape, rep) for w in weights])
        # output tiles only advance (and flush) during the final pass (p == 2)
        out_specs = pl.BlockSpec((1, TS, H), lambda b, p, s: (b, (p // 2) * s, 0))
        kernel = _make_tiled_kernel(TS, H, NH, DH)
        scratch = [pltpu.VMEM((1, NH), jnp.float32),   # running max
                   pltpu.VMEM((1, NH), jnp.float32),   # running sum
                   pltpu.VMEM((NH, H), jnp.float32),   # running pooled accumulator
                   pltpu.VMEM((1, H), jnp.float32),    # pooled query (scaled)
                   pltpu.VMEM((1, H), jnp.float32)]    # pooled key
        dims = ("parallel", "arbitrary", "arbitrary")

    return pl.pallas_call(
        kernel,
        out_shape=jax.ShapeDtypeStruct((B, S, H), out_dtype),
        grid=grid,
        in_specs=in_specs,
        out_specs=out_specs,
        scratch_shapes=scratch,
        compiler_params=pltpu.CompilerParams(
            dimension_semantics=dims,
            vmem_limit_bytes=_vmem_limit_bytes(TS, H, NH)),
        cost_estimate=pl.CostEstimate(
            flops=flops,
            transcendentals=transcendentals,
            bytes_accessed=bytes_accessed),
    )(x16, *weights)


# --------------------------------------------------------------------------
# Reference (plain JAX, f32) + test harness
# --------------------------------------------------------------------------
def ref_fast_self_attention(x, params, num_heads):
    """Plain-JAX f32 mirror of the PyTorch forward (validation path)."""
    B, S, H = x.shape
    NH = num_heads
    DH = H // NH
    scale = 1.0 / math.sqrt(DH)

    mq = x @ params["wq"] + params["bq"]                 # (B,S,H)
    mk = x @ params["wk"] + params["bk"]                 # (B,S,H)

    qfs = (mq @ params["wqa"] + params["bqa"]) * scale   # (B,S,NH)
    qfs = jnp.transpose(qfs, (0, 2, 1))                  # (B,NH,S)
    qw = jax.nn.softmax(qfs, axis=-1)[:, :, None, :]     # (B,NH,1,S)

    ql = mq.reshape(B, S, NH, DH).transpose(0, 2, 1, 3)  # (B,NH,S,DH)
    pq = jnp.matmul(qw, ql).transpose(0, 1, 3, 2)        # (B,NH,DH,1)

    kl = mk.reshape(B, S, NH, DH).transpose(0, 2, 1, 3)  # (B,NH,S,DH)
    qks = jnp.matmul(kl, pq)[..., 0] * scale             # (B,NH,S)
    qkw = jax.nn.softmax(qks, axis=-1)[:, :, None, :]    # (B,NH,1,S)
    pk = jnp.matmul(qkw, kl)                             # (B,NH,1,DH)

    wv = (pk * ql).transpose(0, 2, 1, 3).reshape(B, S, H)
    return wv @ params["wt"] + params["bt"] + mq


def init_params(key, H, NH):
    ks = jax.random.split(key, 8)
    std = 0.05
    return {
        "wq":  jax.random.normal(ks[0], (H, H), jnp.float32) * std,
        "bq":  jax.random.normal(ks[1], (1, H), jnp.float32) * std,
        "wk":  jax.random.normal(ks[2], (H, H), jnp.float32) * std,
        "bk":  jax.random.normal(ks[3], (1, H), jnp.float32) * std,
        "wqa": jax.random.normal(ks[4], (H, NH), jnp.float32) * std,
        "bqa": jax.random.normal(ks[5], (1, NH), jnp.float32) * std,
        "wt":  jax.random.normal(ks[6], (H, H), jnp.float32) * std,
        "bt":  jax.random.normal(ks[7], (1, H), jnp.float32) * std,
    }


if __name__ == "__main__":
    key = jax.random.PRNGKey(0)
    k1, k2, k3, k4 = jax.random.split(key, 4)

    # --- Test 1: small shape, single-pass (whole-sequence) path ---
    B, S, H, NH = 2, 8, 32, 4
    x = jax.random.normal(k1, (B, S, H), jnp.float32)
    params = init_params(k2, H, NH)
    out = jax.block_until_ready(fast_self_attention(x, params, NH))
    ref = jax.block_until_ready(ref_fast_self_attention(x, params, NH))
    # bf16 input/weights/small-matmul operands + approx reciprocal vs f32 ref.
    np.testing.assert_allclose(np.asarray(out), np.asarray(ref),
                               rtol=3e-2, atol=3e-2)

    # --- Test 2: force the S-tiled 3-pass (online-softmax) path ---
    B2, S2, H2, NH2 = 2, 64, 128, 4
    x2 = jax.random.normal(k3, (B2, S2, H2), jnp.float32)
    params2 = init_params(k4, H2, NH2)
    out2 = jax.block_until_ready(
        fast_self_attention(x2, params2, NH2, seq_tile=16))
    ref2 = jax.block_until_ready(ref_fast_self_attention(x2, params2, NH2))
    np.testing.assert_allclose(np.asarray(out2), np.asarray(ref2),
                               rtol=5e-2, atol=5e-2)

    print("KERNEL_OK")
</pallas_src>

<mosaic_0001>
module attributes {stable_mosaic.version = 11 : i64} {
  func.func @kernel(%arg0: i32, %arg1: memref<1x8x32xbf16, #tpu.memory_space<vmem>>, %arg2: memref<32x32xbf16, #tpu.memory_space<vmem>>, %arg3: memref<1x32xf32, #tpu.memory_space<vmem>>, %arg4: memref<32x32xbf16, #tpu.memory_space<vmem>>, %arg5: memref<1x32xf32, #tpu.memory_space<vmem>>, %arg6: memref<32x4xbf16, #tpu.memory_space<vmem>>, %arg7: memref<1x4xf32, #tpu.memory_space<vmem>>, %arg8: memref<32x32xbf16, #tpu.memory_space<vmem>>, %arg9: memref<1x32xf32, #tpu.memory_space<vmem>>, %arg10: memref<32x4xbf16, #tpu.memory_space<vmem>>, %arg11: memref<4x32xf32, #tpu.memory_space<vmem>>, %arg12: memref<1x8x32xf32, #tpu.memory_space<vmem>>) attributes {dimension_semantics = [#tpu.dimension_semantics<parallel>], iteration_bounds = array<i64: 2>, scalar_prefetch = 0 : i64, scratch_operands = 0 : i64, tpu.core_type = #tpu.core_type<tc>, window_params = [{transform_indices = @transform_0, window_bounds = array<i64: 1, 8, 32>}, {pipeline_mode = #tpu.pipeline_mode<synchronous>, transform_indices = @transform_1, window_bounds = array<i64: 32, 32>}, {pipeline_mode = #tpu.pipeline_mode<synchronous>, transform_indices = @transform_2, window_bounds = array<i64: 1, 32>}, {pipeline_mode = #tpu.pipeline_mode<synchronous>, transform_indices = @transform_3, window_bounds = array<i64: 32, 32>}, {pipeline_mode = #tpu.pipeline_mode<synchronous>, transform_indices = @transform_4, window_bounds = array<i64: 1, 32>}, {pipeline_mode = #tpu.pipeline_mode<synchronous>, transform_indices = @transform_5, window_bounds = array<i64: 32, 4>}, {pipeline_mode = #tpu.pipeline_mode<synchronous>, transform_indices = @transform_6, window_bounds = array<i64: 1, 4>}, {pipeline_mode = #tpu.pipeline_mode<synchronous>, transform_indices = @transform_7, window_bounds = array<i64: 32, 32>}, {pipeline_mode = #tpu.pipeline_mode<synchronous>, transform_indices = @transform_8, window_bounds = array<i64: 1, 32>}, {pipeline_mode = #tpu.pipeline_mode<synchronous>, transform_indices = @transform_9, window_bounds = array<i64: 32, 4>}, {pipeline_mode = #tpu.pipeline_mode<synchronous>, transform_indices = @transform_10, window_bounds = array<i64: 4, 32>}, {transform_indices = @transform_11, window_bounds = array<i64: 1, 8, 32>}]} {
    %c0 = arith.constant 0 : index
    %c0_0 = arith.constant 0 : index
    %c0_1 = arith.constant 0 : index
    %0 = vector.load %arg1[%c0, %c0_0, %c0_1] : memref<1x8x32xbf16, #tpu.memory_space<vmem>>, vector<1x8x32xbf16>
    %1 = vector.shape_cast %0 : vector<1x8x32xbf16> to vector<8x32xbf16>
    %c0_2 = arith.constant 0 : index
    %c0_3 = arith.constant 0 : index
    %2 = vector.load %arg11[%c0_2, %c0_3] : memref<4x32xf32, #tpu.memory_space<vmem>>, vector<4x32xf32>
    %c0_4 = arith.constant 0 : index
    %c0_5 = arith.constant 0 : index
    %3 = vector.load %arg2[%c0_4, %c0_5] : memref<32x32xbf16, #tpu.memory_space<vmem>>, vector<32x32xbf16>
    %cst = arith.constant dense<0.000000e+00> : vector<8x32xf32>
    %4 = tpu.matmul %1, %3, %cst {dimension_numbers = #tpu.dot_dimension_numbers<[1], [0], [0], [1], [0, 0, 1, 1], [], []>} : vector<8x32xbf16>, vector<32x32xbf16>, vector<8x32xf32> -> vector<8x32xf32>
    %c0_6 = arith.constant 0 : index
    %c0_7 = arith.constant 0 : index
    %5 = vector.load %arg3[%c0_6, %c0_7] : memref<1x32xf32, #tpu.memory_space<vmem>>, vector<1x32xf32>
    %6 = vector.broadcast %5 : vector<1x32xf32> to vector<8x32xf32>
    %7 = arith.addf %4, %6 : vector<8x32xf32>
    %c0_8 = arith.constant 0 : index
    %c0_9 = arith.constant 0 : index
    %8 = vector.load %arg4[%c0_8, %c0_9] : memref<32x32xbf16, #tpu.memory_space<vmem>>, vector<32x32xbf16>
    %cst_10 = arith.constant dense<0.000000e+00> : vector<8x32xf32>
    %9 = tpu.matmul %1, %8, %cst_10 {dimension_numbers = #tpu.dot_dimension_numbers<[1], [0], [0], [1], [0, 0, 1, 1], [], []>} : vector<8x32xbf16>, vector<32x32xbf16>, vector<8x32xf32> -> vector<8x32xf32>
    %c0_11 = arith.constant 0 : index
    %c0_12 = arith.constant 0 : index
    %10 = vector.load %arg5[%c0_11, %c0_12] : memref<1x32xf32, #tpu.memory_space<vmem>>, vector<1x32xf32>
    %11 = vector.broadcast %10 : vector<1x32xf32> to vector<8x32xf32>
    %12 = arith.addf %9, %11 : vector<8x32xf32>
    %13 = arith.truncf %7 : vector<8x32xf32> to vector<8x32xbf16>
    %14 = arith.truncf %12 : vector<8x32xf32> to vector<8x32xbf16>
    %c0_13 = arith.constant 0 : index
    %c0_14 = arith.constant 0 : index
    %15 = vector.load %arg6[%c0_13, %c0_14] : memref<32x4xbf16, #tpu.memory_space<vmem>>, vector<32x4xbf16>
    %cst_15 = arith.constant dense<0.000000e+00> : vector<8x4xf32>
    %16 = tpu.matmul %13, %15, %cst_15 {dimension_numbers = #tpu.dot_dimension_numbers<[1], [0], [0], [1], [0, 0, 1, 1], [], []>} : vector<8x32xbf16>, vector<32x4xbf16>, vector<8x4xf32> -> vector<8x4xf32>
    %c0_16 = arith.constant 0 : index
    %c0_17 = arith.constant 0 : index
    %17 = vector.load %arg7[%c0_16, %c0_17] : memref<1x4xf32, #tpu.memory_space<vmem>>, vector<1x4xf32>
    %18 = vector.broadcast %17 : vector<1x4xf32> to vector<8x4xf32>
    %19 = arith.addf %16, %18 : vector<8x4xf32>
    %cst_18 = arith.constant dense<0xFF800000> : vector<4xf32>
    %20 = vector.multi_reduction <maximumf>, %19, %cst_18 [0] : vector<8x4xf32> to vector<4xf32>
    %21 = vector.shape_cast %20 : vector<4xf32> to vector<1x4xf32>
    %22 = vector.broadcast %21 : vector<1x4xf32> to vector<8x4xf32>
    %23 = arith.subf %19, %22 : vector<8x4xf32>
    %24 = math.exp %23 : vector<8x4xf32>
    %cst_19 = arith.constant dense<0.000000e+00> : vector<4xf32>
    %25 = vector.multi_reduction <add>, %24, %cst_19 [0] : vector<8x4xf32> to vector<4xf32>
    %26 = vector.shape_cast %25 : vector<4xf32> to vector<1x4xf32>
    %27 = tpu.reciprocal %26 {approx = true} : vector<1x4xf32> -> vector<1x4xf32>
    %28 = arith.truncf %24 : vector<8x4xf32> to vector<8x4xbf16>
    %cst_20 = arith.constant dense<0.000000e+00> : vector<4x32xf32>
    %29 = tpu.matmul %28, %13, %cst_20 {dimension_numbers = #tpu.dot_dimension_numbers<[0], [0], [1], [1], [0, 1, 1, 1], [], []>} : vector<8x4xbf16>, vector<8x32xbf16>, vector<4x32xf32> -> vector<4x32xf32>
    %cst_21 = arith.constant dense<0.000000e+00> : vector<1x32xf32>
    %30 = tpu.matmul %27, %2, %cst_21 {dimension_numbers = #tpu.dot_dimension_numbers<[1], [0], [0], [1], [0, 0, 1, 1], [], []>} : vector<1x4xf32>, vector<4x32xf32>, vector<1x32xf32> -> vector<1x32xf32>
    %31 = arith.mulf %29, %2 : vector<4x32xf32>
    %cst_22 = arith.constant dense<0.000000e+00> : vector<32xf32>
    %32 = vector.multi_reduction <add>, %31, %cst_22 [0] : vector<4x32xf32> to vector<32xf32>
    %33 = vector.shape_cast %32 : vector<32xf32> to vector<1x32xf32>
    %34 = arith.mulf %33, %30 : vector<1x32xf32>
    %cst_23 = arith.constant 0.353553385 : f32
    %35 = vector.broadcast %cst_23 : f32 to vector<1x32xf32>
    %36 = arith.mulf %34, %35 : vector<1x32xf32>
    %37 = vector.broadcast %36 : vector<1x32xf32> to vector<8x32xf32>
    %38 = arith.mulf %12, %37 : vector<8x32xf32>
    %39 = arith.truncf %38 : vector<8x32xf32> to vector<8x32xbf16>
    %c0_24 = arith.constant 0 : index
    %c0_25 = arith.constant 0 : index
    %40 = vector.load %arg10[%c0_24, %c0_25] : memref<32x4xbf16, #tpu.memory_space<vmem>>, vector<32x4xbf16>
    %cst_26 = arith.constant dense<0.000000e+00> : vector<8x4xf32>
    %41 = tpu.matmul %39, %40, %cst_26 {dimension_numbers = #tpu.dot_dimension_numbers<[1], [0], [0], [1], [0, 0, 1, 1], [], []>} : vector<8x32xbf16>, vector<32x4xbf16>, vector<8x4xf32> -> vector<8x4xf32>
    %cst_27 = arith.constant dense<0xFF800000> : vector<4xf32>
    %42 = vector.multi_reduction <maximumf>, %41, %cst_27 [0] : vector<8x4xf32> to vector<4xf32>
    %43 = vector.shape_cast %42 : vector<4xf32> to vector<1x4xf32>
    %44 = vector.broadcast %43 : vector<1x4xf32> to vector<8x4xf32>
    %45 = arith.subf %41, %44 : vector<8x4xf32>
    %46 = math.exp %45 : vector<8x4xf32>
    %cst_28 = arith.constant dense<0.000000e+00> : vector<4xf32>
    %47 = vector.multi_reduction <add>, %46, %cst_28 [0] : vector<8x4xf32> to vector<4xf32>
    %48 = vector.shape_cast %47 : vector<4xf32> to vector<1x4xf32>
    %49 = tpu.reciprocal %48 {approx = true} : vector<1x4xf32> -> vector<1x4xf32>
    %50 = arith.truncf %46 : vector<8x4xf32> to vector<8x4xbf16>
    %cst_29 = arith.constant dense<0.000000e+00> : vector<4x32xf32>
    %51 = tpu.matmul %50, %14, %cst_29 {dimension_numbers = #tpu.dot_dimension_numbers<[0], [0], [1], [1], [0, 1, 1, 1], [], []>} : vector<8x4xbf16>, vector<8x32xbf16>, vector<4x32xf32> -> vector<4x32xf32>
    %cst_30 = arith.constant dense<0.000000e+00> : vector<1x32xf32>
    %52 = tpu.matmul %49, %2, %cst_30 {dimension_numbers = #tpu.dot_dimension_numbers<[1], [0], [0], [1], [0, 0, 1, 1], [], []>} : vector<1x4xf32>, vector<4x32xf32>, vector<1x32xf32> -> vector<1x32xf32>
    %53 = arith.mulf %51, %2 : vector<4x32xf32>
    %cst_31 = arith.constant dense<0.000000e+00> : vector<32xf32>
    %54 = vector.multi_reduction <add>, %53, %cst_31 [0] : vector<4x32xf32> to vector<32xf32>
    %55 = vector.shape_cast %54 : vector<32xf32> to vector<1x32xf32>
    %56 = arith.mulf %55, %52 : vector<1x32xf32>
    %57 = vector.broadcast %56 : vector<1x32xf32> to vector<8x32xf32>
    %58 = arith.mulf %57, %7 : vector<8x32xf32>
    %59 = arith.truncf %58 : vector<8x32xf32> to vector<8x32xbf16>
    %c0_32 = arith.constant 0 : index
    %c0_33 = arith.constant 0 : index
    %60 = vector.load %arg8[%c0_32, %c0_33] : memref<32x32xbf16, #tpu.memory_space<vmem>>, vector<32x32xbf16>
    %cst_34 = arith.constant dense<0.000000e+00> : vector<8x32xf32>
    %61 = tpu.matmul %59, %60, %cst_34 {dimension_numbers = #tpu.dot_dimension_numbers<[1], [0], [0], [1], [0, 0, 1, 1], [], []>} : vector<8x32xbf16>, vector<32x32xbf16>, vector<8x32xf32> -> vector<8x32xf32>
    %c0_35 = arith.constant 0 : index
    %c0_36 = arith.constant 0 : index
    %62 = vector.load %arg9[%c0_35, %c0_36] : memref<1x32xf32, #tpu.memory_space<vmem>>, vector<1x32xf32>
    %63 = vector.broadcast %62 : vector<1x32xf32> to vector<8x32xf32>
    %64 = arith.addf %61, %63 : vector<8x32xf32>
    %65 = arith.addf %64, %7 : vector<8x32xf32>
    %c0_37 = arith.constant 0 : index
    %c0_38 = arith.constant 0 : index
    %c0_39 = arith.constant 0 : index
    %66 = vector.load %arg12[%c0_37, %c0_38, %c0_39] : memref<1x8x32xf32, #tpu.memory_space<vmem>>, vector<1x8x32xf32>
    %67 = vector.shape_cast %66 : vector<1x8x32xf32> to vector<8x32xf32>
    %68 = vector.shape_cast %65 : vector<8x32xf32> to vector<1x8x32xf32>
    tpu.vector_store %arg12[%c0_37, %c0_38, %c0_39], %68 {strides = array<i32>} : memref<1x8x32xf32, #tpu.memory_space<vmem>>, vector<1x8x32xf32>,
    return
  }
  func.func @transform_0(%arg0: i32) -> (i32, i32, i32) {
    %c0_i32 = arith.constant 0 : i32
    %c0_i32_0 = arith.constant 0 : i32
    %c0_i32_1 = arith.constant 0 : i32
    return %arg0, %c0_i32, %c0_i32_0 : i32, i32, i32
  }
  func.func @transform_1(%arg0: i32) -> (i32, i32) {
    %c0_i32 = arith.constant 0 : i32
    %c0_i32_0 = arith.constant 0 : i32
    %c0_i32_1 = arith.constant 0 : i32
    return %c0_i32, %c0_i32_0 : i32, i32
  }
  func.func @transform_2(%arg0: i32) -> (i32, i32) {
    %c0_i32 = arith.constant 0 : i32
    %c0_i32_0 = arith.constant 0 : i32
    %c0_i32_1 = arith.constant 0 : i32
    return %c0_i32, %c0_i32_0 : i32, i32
  }
  func.func @transform_3(%arg0: i32) -> (i32, i32) {
    %c0_i32 = arith.constant 0 : i32
    %c0_i32_0 = arith.constant 0 : i32
    %c0_i32_1 = arith.constant 0 : i32
    return %c0_i32, %c0_i32_0 : i32, i32
  }
  func.func @transform_4(%arg0: i32) -> (i32, i32) {
    %c0_i32 = arith.constant 0 : i32
    %c0_i32_0 = arith.constant 0 : i32
    %c0_i32_1 = arith.constant 0 : i32
    return %c0_i32, %c0_i32_0 : i32, i32
  }
  func.func @transform_5(%arg0: i32) -> (i32, i32) {
    %c0_i32 = arith.constant 0 : i32
    %c0_i32_0 = arith.constant 0 : i32
    %c0_i32_1 = arith.constant 0 : i32
    return %c0_i32, %c0_i32_0 : i32, i32
  }
  func.func @transform_6(%arg0: i32) -> (i32, i32) {
    %c0_i32 = arith.constant 0 : i32
    %c0_i32_0 = arith.constant 0 : i32
    %c0_i32_1 = arith.constant 0 : i32
    return %c0_i32, %c0_i32_0 : i32, i32
  }
  func.func @transform_7(%arg0: i32) -> (i32, i32) {
    %c0_i32 = arith.constant 0 : i32
    %c0_i32_0 = arith.constant 0 : i32
    %c0_i32_1 = arith.constant 0 : i32
    return %c0_i32, %c0_i32_0 : i32, i32
  }
  func.func @transform_8(%arg0: i32) -> (i32, i32) {
    %c0_i32 = arith.constant 0 : i32
    %c0_i32_0 = arith.constant 0 : i32
    %c0_i32_1 = arith.constant 0 : i32
    return %c0_i32, %c0_i32_0 : i32, i32
  }
  func.func @transform_9(%arg0: i32) -> (i32, i32) {
    %c0_i32 = arith.constant 0 : i32
    %c0_i32_0 = arith.constant 0 : i32
    %c0_i32_1 = arith.constant 0 : i32
    return %c0_i32, %c0_i32_0 : i32, i32
  }
  func.func @transform_10(%arg0: i32) -> (i32, i32) {
    %c0_i32 = arith.constant 0 : i32
    %c0_i32_0 = arith.constant 0 : i32
    %c0_i32_1 = arith.constant 0 : i32
    return %c0_i32, %c0_i32_0 : i32, i32
  }
  func.func @transform_11(%arg0: i32) -> (i32, i32, i32) {
    %c0_i32 = arith.constant 0 : i32
    %c0_i32_0 = arith.constant 0 : i32
    %c0_i32_1 = arith.constant 0 : i32
    return %arg0, %c0_i32, %c0_i32_0 : i32, i32, i32
  }
}

</mosaic_0001>

<llo_original>
// kernel: tpu_custom_call.1
$region0: #{tpu_custom_call.1}
  #allocation0 [shape = 'u32[]', space=smem, size = 0x4, offset = 0x4, fixed_abs, tag = 'smem constant byte address 0x4 - core index']
  #allocation1 [shape = 'u32[144,128]{1,0:T(1,128)}', space=vmem, size = 0x12000, scoped, tag = 'internal scratch']
  %s0 = inlined_call_operand.hbm [shape: bf16[2,8,32], index: 0, kind: input, shape index: {}]
  %s1 = inlined_call_operand.vmem [shape: bf16[32,32], index: 1, kind: input, shape index: {}]
  %s2 = inlined_call_operand.hbm [shape: f32[1,32], index: 2, kind: input, shape index: {}]
  %s3 = inlined_call_operand.vmem [shape: bf16[32,32], index: 3, kind: input, shape index: {}]
  %s4 = inlined_call_operand.hbm [shape: f32[1,32], index: 4, kind: input, shape index: {}]
  %s5 = inlined_call_operand.vmem [shape: bf16[32,4], index: 5, kind: input, shape index: {}]
  %s6 = inlined_call_operand.vmem [shape: f32[1,4], index: 6, kind: input, shape index: {}]
  %s7 = inlined_call_operand.vmem [shape: bf16[32,32], index: 7, kind: input, shape index: {}]
  %s8 = inlined_call_operand.vmem [shape: f32[1,32], index: 8, kind: input, shape index: {}]
  %s9 = inlined_call_operand.vmem [shape: bf16[32,4], index: 9, kind: input, shape index: {}]
  %s10 = inlined_call_operand.vmem [shape: f32[4,32], index: 10, kind: input, shape index: {}]
  %s11 = inlined_call_operand.hbm [shape: f32[2,8,32], index: 11, kind: output, shape index: {}]
  %s12 = sld [smem:[#allocation0]]
  $region89: #{tpu_custom_call.1} parent=0
    _
  %s14 = ssub.s32 1, %s12
  %s15 = scalar_select 0, %s14, %s12
  $region1: #{tpu_custom_call.1} parent=0
    #allocation2 [shape = 'u8[4096]{0}', space=vmem, size = 0x1000, scoped, tag = 'input window, operand 0']
    #allocation3 [shape = 's32[2]{0}', space=sflag, size = 0x8, scoped, tag = 'scoped memory for tpu_custom_call.1']
    #allocation4 [shape = 's32[2]{0}', space=sflag, size = 0x8, scoped, tag = 'scoped memory for tpu_custom_call.1']
    #allocation5 [shape = 'u8[512]{0}', space=vmem, size = 0x400, scoped, tag = 'input window, operand 2, single buffered']
    #allocation6 [shape = 's32[1]{0}', space=sflag, size = 0x4, scoped, tag = 'scoped memory for tpu_custom_call.1']
    #allocation7 [shape = 'u8[512]{0}', space=vmem, size = 0x400, scoped, tag = 'input window, operand 4, single buffered']
    #allocation8 [shape = 'u8[8192]{0}', space=vmem, size = 0x2000, scoped, tag = 'output window, operand 0']
    %16 = vsyncpa [#allocation3], 0
    %s17 = scalar_lea.sflag [#allocation3], 1
    %18 = vsyncpa %s17, 0
    %19 = vsyncpa [#allocation6], 0
    %20 = vsyncpa [#allocation4], 0
    %s21 = scalar_lea.sflag [#allocation4], 1
    %22 = vsyncpa %s21, 0
    loop: start=0, step=1, limit=4
    $region2: #{tpu_custom_call.1} parent=1 // loop_pre_header
      _
    $region3: #{tpu_custom_call.1} parent=1 // loop_header
      %s24 = sphi 0, %s28
      %p25 = scmp.ge.s32.totalorder %s24, 4
      %s34 = sphi 0, %s36
      %s37 = sphi 0, %s34
      %s38 = sphi 0, %s37
      %s54 = sphi 0, %s38
      %s58 = sphi 0, %s58
      %s60 = sphi 0, %s58
      %s61 = sphi 0, %s60
      %s75 = sphi 0, %s61
      %s79 = sphi 0, %s79
      %s81 = sphi 0, %s79
      %s82 = sphi 0, %s81
      %s96 = sphi 0, %s82
      %s100 = sphi 0, %s100
      %s102 = sphi 0, %s100
      %s103 = sphi 0, %s102
      %s117 = sphi 0, %s103
      %s121 = sphi 0, %s121
      %s123 = sphi 0, %s121
      %s124 = sphi 0, %s123
      %s138 = sphi 0, %s124
      %s142 = sphi 0, %s142
      %s144 = sphi 0, %s142
      %s145 = sphi 0, %s144
      %s159 = sphi 0, %s145
      %s163 = sphi 0, %s163
      %s165 = sphi 0, %s163
      %s166 = sphi 0, %s165
      %s180 = sphi 0, %s166
      %s184 = sphi 0, %s184
      %s186 = sphi 0, %s184
      %s187 = sphi 0, %s186
      %s201 = sphi 0, %s187
      %s205 = sphi 0, %s205
      %s207 = sphi 0, %s205
      %s208 = sphi 0, %s207
      %s222 = sphi 0, %s208
      %s226 = sphi 0, %s226
      %s228 = sphi 0, %s226
      %s229 = sphi 0, %s228
      %s243 = sphi 0, %s229
      %s247 = sphi 0, %s247
      %s249 = sphi 0, %s247
      %s250 = sphi 0, %s249
      %s264 = sphi 0, %s250
      %s270 = sphi 0, %s272
      %s273 = sphi 0, %s270
      %s274 = sphi 0, %s273
      %s290 = sphi 0, %s274
    $region4: #{tpu_custom_call.1} parent=1 // loop_header_branch
      %27 = sbr.rel (%p25) target = $region8
    $region5: #{tpu_custom_call.1} parent=1 // loop_body
      %s29 = ssub.s32 %s24, 1
      %s30 = ssub.s32 %s24, 2
      %s31 = sadd.s32 %s24, 1
      %s32 = ssub.s32 %s24, %s31
      %p33 = scmp.eq.s32.totalorder %s32, 0
      %s35 = sadd.s32 %s34, 1
      %s36 = scalar_select %p33, %s34, %s35
      %p39 = pneg %p33
      %p40 = scmp.eq.s32.totalorder %s24, 1
      %p41 = por %p39, %p40
      %p42 = scmp.ne.s32.totalorder %s34, %s37
      %p43 = scmp.eq.s32.totalorder %s24, 0
      %p44 = por %p42, %p43
      %p45 = scmp.ne.s32.totalorder %s34, %s37
      %p46 = scmp.eq.s32.totalorder %s29, 1
      %p47 = por %p45, %p46
      %p48 = scmp.ne.s32.totalorder %s37, %s38
      %p49 = scmp.eq.s32.totalorder %s29, 0
      %p50 = por %p48, %p49
      %p51 = scmp.ne.s32.totalorder %s37, %s38
      %p52 = scmp.eq.s32.totalorder %s30, 1
      %p53 = por %p51, %p52
      %p55 = scmp.ne.s32.totalorder %s38, %s54
      %p56 = scmp.eq.s32.totalorder %s30, 0
      %p57 = por %p55, %p56
      %s59 = sadd.s32 %s58, 1
      %p62 = scmp.eq.s32.totalorder %s24, 1
      %p63 = scmp.ne.s32.totalorder %s58, %s60
      %p64 = scmp.eq.s32.totalorder %s24, 0
      %p65 = por %p63, %p64
      %p66 = scmp.ne.s32.totalorder %s58, %s60
      %p67 = scmp.eq.s32.totalorder %s29, 1
      %p68 = por %p66, %p67
      %p69 = scmp.ne.s32.totalorder %s60, %s61
      %p70 = scmp.eq.s32.totalorder %s29, 0
      %p71 = por %p69, %p70
      %p72 = scmp.ne.s32.totalorder %s60, %s61
      %p73 = scmp.eq.s32.totalorder %s30, 1
      %p74 = por %p72, %p73
      %p76 = scmp.ne.s32.totalorder %s61, %s75
      %p77 = scmp.eq.s32.totalorder %s30, 0
      %p78 = por %p76, %p77
      %s80 = sadd.s32 %s79, 1
      %p83 = scmp.eq.s32.totalorder %s24, 1
      %p84 = scmp.ne.s32.totalorder %s79, %s81
      %p85 = scmp.eq.s32.totalorder %s24, 0
      %p86 = por %p84, %p85
      %p87 = scmp.ne.s32.totalorder %s79, %s81
      %p88 = scmp.eq.s32.totalorder %s29, 1
      %p89 = por %p87, %p88
      %p90 = scmp.ne.s32.totalorder %s81, %s82
      %p91 = scmp.eq.s32.totalorder %s29, 0
      %p92 = por %p90, %p91
      %p93 = scmp.ne.s32.totalorder %s81, %s82
      %p94 = scmp.eq.s32.totalorder %s30, 1
      %p95 = por %p93, %p94
      %p97 = scmp.ne.s32.totalorder %s82, %s96
      %p98 = scmp.eq.s32.totalorder %s30, 0
      %p99 = por %p97, %p98
      %s101 = sadd.s32 %s100, 1
      %p104 = scmp.eq.s32.totalorder %s24, 1
      %p105 = scmp.ne.s32.totalorder %s100, %s102
      %p106 = scmp.eq.s32.totalorder %s24, 0
      %p107 = por %p105, %p106
      %p108 = scmp.ne.s32.totalorder %s100, %s102
      %p109 = scmp.eq.s32.totalorder %s29, 1
      %p110 = por %p108, %p109
      %p111 = scmp.ne.s32.totalorder %s102, %s103
      %p112 = scmp.eq.s32.totalorder %s29, 0
      %p113 = por %p111, %p112
      %p114 = scmp.ne.s32.totalorder %s102, %s103
      %p115 = scmp.eq.s32.totalorder %s30, 1
      %p116 = por %p114, %p115
      %p118 = scmp.ne.s32.totalorder %s103, %s117
      %p119 = scmp.eq.s32.totalorder %s30, 0
      %p120 = por %p118, %p119
      %s122 = sadd.s32 %s121, 1
      %p125 = scmp.eq.s32.totalorder %s24, 1
      %p126 = scmp.ne.s32.totalorder %s121, %s123
      %p127 = scmp.eq.s32.totalorder %s24, 0
      %p128 = por %p126, %p127
      %p129 = scmp.ne.s32.totalorder %s121, %s123
      %p130 = scmp.eq.s32.totalorder %s29, 1
      %p131 = por %p129, %p130
      %p132 = scmp.ne.s32.totalorder %s123, %s124
      %p133 = scmp.eq.s32.totalorder %s29, 0
      %p134 = por %p132, %p133
      %p135 = scmp.ne.s32.totalorder %s123, %s124
      %p136 = scmp.eq.s32.totalorder %s30, 1
      %p137 = por %p135, %p136
      %p139 = scmp.ne.s32.totalorder %s124, %s138
      %p140 = scmp.eq.s32.totalorder %s30, 0
      %p141 = por %p139, %p140
      %s143 = sadd.s32 %s142, 1
      %p146 = scmp.eq.s32.totalorder %s24, 1
      %p147 = scmp.ne.s32.totalorder %s142, %s144
      %p148 = scmp.eq.s32.totalorder %s24, 0
      %p149 = por %p147, %p148
      %p150 = scmp.ne.s32.totalorder %s142, %s144
      %p151 = scmp.eq.s32.totalorder %s29, 1
      %p152 = por %p150, %p151
      %p153 = scmp.ne.s32.totalorder %s144, %s145
      %p154 = scmp.eq.s32.totalorder %s29, 0
      %p155 = por %p153, %p154
      %p156 = scmp.ne.s32.totalorder %s144, %s145
      %p157 = scmp.eq.s32.totalorder %s30, 1
      %p158 = por %p156, %p157
      %p160 = scmp.ne.s32.totalorder %s145, %s159
      %p161 = scmp.eq.s32.totalorder %s30, 0
      %p162 = por %p160, %p161
      %s164 = sadd.s32 %s163, 1
      %p167 = scmp.eq.s32.totalorder %s24, 1
      %p168 = scmp.ne.s32.totalorder %s163, %s165
      %p169 = scmp.eq.s32.totalorder %s24, 0
      %p170 = por %p168, %p169
      %p171 = scmp.ne.s32.totalorder %s163, %s165
      %p172 = scmp.eq.s32.totalorder %s29, 1
      %p173 = por %p171, %p172
      %p174 = scmp.ne.s32.totalorder %s165, %s166
      %p175 = scmp.eq.s32.totalorder %s29, 0
      %p176 = por %p174, %p175
      %p177 = scmp.ne.s32.totalorder %s165, %s166
      %p178 = scmp.eq.s32.totalorder %s30, 1
      %p179 = por %p177, %p178
      %p181 = scmp.ne.s32.totalorder %s166, %s180
      %p182 = scmp.eq.s32.totalorder %s30, 0
      %p183 = por %p181, %p182
      %s185 = sadd.s32 %s184, 1
      %p188 = scmp.eq.s32.totalorder %s24, 1
      %p189 = scmp.ne.s32.totalorder %s184, %s186
      %p190 = scmp.eq.s32.totalorder %s24, 0
      %p191 = por %p189, %p190
      %p192 = scmp.ne.s32.totalorder %s184, %s186
      %p193 = scmp.eq.s32.totalorder %s29, 1
      %p194 = por %p192, %p193
      %p195 = scmp.ne.s32.totalorder %s186, %s187
      %p196 = scmp.eq.s32.totalorder %s29, 0
      %p197 = por %p195, %p196
      %p198 = scmp.ne.s32.totalorder %s186, %s187
      %p199 = scmp.eq.s32.totalorder %s30, 1
      %p200 = por %p198, %p199
      %p202 = scmp.ne.s32.totalorder %s187, %s201
      %p203 = scmp.eq.s32.totalorder %s30, 0
      %p204 = por %p202, %p203
      %s206 = sadd.s32 %s205, 1
      %p209 = scmp.eq.s32.totalorder %s24, 1
      %p210 = scmp.ne.s32.totalorder %s205, %s207
      %p211 = scmp.eq.s32.totalorder %s24, 0
      %p212 = por %p210, %p211
      %p213 = scmp.ne.s32.totalorder %s205, %s207
      %p214 = scmp.eq.s32.totalorder %s29, 1
      %p215 = por %p213, %p214
      %p216 = scmp.ne.s32.totalorder %s207, %s208
      %p217 = scmp.eq.s32.totalorder %s29, 0
      %p218 = por %p216, %p217
      %p219 = scmp.ne.s32.totalorder %s207, %s208
      %p220 = scmp.eq.s32.totalorder %s30, 1
      %p221 = por %p219, %p220
      %p223 = scmp.ne.s32.totalorder %s208, %s222
      %p224 = scmp.eq.s32.totalorder %s30, 0
      %p225 = por %p223, %p224
      %s227 = sadd.s32 %s226, 1
      %p230 = scmp.eq.s32.totalorder %s24, 1
      %p231 = scmp.ne.s32.totalorder %s226, %s228
      %p232 = scmp.eq.s32.totalorder %s24, 0
      %p233 = por %p231, %p232
      %p234 = scmp.ne.s32.totalorder %s226, %s228
      %p235 = scmp.eq.s32.totalorder %s29, 1
      %p236 = por %p234, %p235
      %p237 = scmp.ne.s32.totalorder %s228, %s229
      %p238 = scmp.eq.s32.totalorder %s29, 0
      %p239 = por %p237, %p238
      %p240 = scmp.ne.s32.totalorder %s228, %s229
      %p241 = scmp.eq.s32.totalorder %s30, 1
      %p242 = por %p240, %p241
      %p244 = scmp.ne.s32.totalorder %s229, %s243
      %p245 = scmp.eq.s32.totalorder %s30, 0
      %p246 = por %p244, %p245
      %s248 = sadd.s32 %s247, 1
      %p251 = scmp.eq.s32.totalorder %s24, 1
      %p252 = scmp.ne.s32.totalorder %s247, %s249
      %p253 = scmp.eq.s32.totalorder %s24, 0
      %p254 = por %p252, %p253
      %p255 = scmp.ne.s32.totalorder %s247, %s249
      %p256 = scmp.eq.s32.totalorder %s29, 1
      %p257 = por %p255, %p256
      %p258 = scmp.ne.s32.totalorder %s249, %s250
      %p259 = scmp.eq.s32.totalorder %s29, 0
      %p260 = por %p258, %p259
      %p261 = scmp.ne.s32.totalorder %s249, %s250
      %p262 = scmp.eq.s32.totalorder %s30, 1
      %p263 = por %p261, %p262
      %p265 = scmp.ne.s32.totalorder %s250, %s264
      %p266 = scmp.eq.s32.totalorder %s30, 0
      %p267 = por %p265, %p266
      %s268 = ssub.s32 %s24, %s31
      %p269 = scmp.eq.s32.totalorder %s268, 0
      %s271 = sadd.s32 %s270, 1
      %s272 = scalar_select %p269, %s270, %s271
      %p275 = pneg %p269
      %p276 = scmp.eq.s32.totalorder %s24, 1
      %p277 = por %p275, %p276
      %p278 = scmp.ne.s32.totalorder %s270, %s273
      %p279 = scmp.eq.s32.totalorder %s24, 0
      %p280 = por %p278, %p279
      %p281 = scmp.ne.s32.totalorder %s270, %s273
      %p282 = scmp.eq.s32.totalorder %s29, 1
      %p283 = por %p281, %p282
      %p284 = scmp.ne.s32.totalorder %s273, %s274
      %p285 = scmp.eq.s32.totalorder %s29, 0
      %p286 = por %p284, %p285
      %p287 = scmp.ne.s32.totalorder %s273, %s274
      %p288 = scmp.eq.s32.totalorder %s30, 1
      %p289 = por %p287, %p288
      %p291 = scmp.ne.s32.totalorder %s274, %s290
      %p292 = scmp.eq.s32.totalorder %s30, 0
      %p293 = por %p291, %p292
      %p294 = scmp.le.s32.totalorder 1, %s24
      %p295 = scmp.lt.s32.totalorder %s24, 3
      %p296 = pnand %p294, %p295
      %p297 = pneg %p296
      // Predicated region
      $region9: #{tpu_custom_call.1} parent=5 // pred_check
        _
      $region10: #{tpu_custom_call.1} parent=5 // pred_check_branch
        %299 = sbr.rel (%p296) target = $region12
      $region11: #{tpu_custom_call.1} parent=5 // pred_region
        %s300 = ssub.s32 %s24, 1
        // Predicated region
        $region13: #{tpu_custom_call.1} parent=11 // pred_check
          %p301 = pneg %p71
        $region14: #{tpu_custom_call.1} parent=11 // pred_check_branch
          %303 = sbr.rel (%p301) target = $region16
        $region15: #{tpu_custom_call.1} parent=11 // pred_region
          _
        $region16: #{tpu_custom_call.1} parent=11 // pred_fallthru
          _
        // Predicated region
        $region17: #{tpu_custom_call.1} parent=11 // pred_check
          %p304 = pneg %p92
        $region18: #{tpu_custom_call.1} parent=11 // pred_check_branch
          %306 = sbr.rel (%p304) target = $region20
        $region19: #{tpu_custom_call.1} parent=11 // pred_region
          %s308 = ssub.s32 16, 16
          %309 = vsyncadd [#allocation6], %s308
          %s311 = sshll.u32 [#allocation5], 4
          %s312 = int_to_ptr.vmem [resolvable:$true] %s311
          %314 = dma.hbm_to_vmem [thread:$0]  %s2, 16, %s312, [#allocation6]
        $region20: #{tpu_custom_call.1} parent=11 // pred_fallthru
          _
        // Predicated region
        $region21: #{tpu_custom_call.1} parent=11 // pred_check
          %p315 = pneg %p113
        $region22: #{tpu_custom_call.1} parent=11 // pred_check_branch
          %317 = sbr.rel (%p315) target = $region24
        $region23: #{tpu_custom_call.1} parent=11 // pred_region
          _
        $region24: #{tpu_custom_call.1} parent=11 // pred_fallthru
          _
        // Predicated region
        $region25: #{tpu_custom_call.1} parent=11 // pred_check
          %p318 = pneg %p134
        $region26: #{tpu_custom_call.1} parent=11 // pred_check_branch
          %320 = sbr.rel (%p318) target = $region28
        $region27: #{tpu_custom_call.1} parent=11 // pred_region
          %s322 = ssub.s32 16, 16
          %323 = vsyncadd [#allocation6], %s322
          %s325 = sshll.u32 [#allocation7], 4
          %s326 = int_to_ptr.vmem [resolvable:$true] %s325
          %328 = dma.hbm_to_vmem [thread:$0]  %s4, 16, %s326, [#allocation6]
        $region28: #{tpu_custom_call.1} parent=11 // pred_fallthru
          _
        // Predicated region
        $region29: #{tpu_custom_call.1} parent=11 // pred_check
          %p329 = pneg %p155
        $region30: #{tpu_custom_call.1} parent=11 // pred_check_branch
          %331 = sbr.rel (%p329) target = $region32
        $region31: #{tpu_custom_call.1} parent=11 // pred_region
          _
        $region32: #{tpu_custom_call.1} parent=11 // pred_fallthru
          _
        // Predicated region
        $region33: #{tpu_custom_call.1} parent=11 // pred_check
          %p332 = pneg %p176
        $region34: #{tpu_custom_call.1} parent=11 // pred_check_branch
          %334 = sbr.rel (%p332) target = $region36
        $region35: #{tpu_custom_call.1} parent=11 // pred_region
          _
        $region36: #{tpu_custom_call.1} parent=11 // pred_fallthru
          _
        // Predicated region
        $region37: #{tpu_custom_call.1} parent=11 // pred_check
          %p335 = pneg %p197
        $region38: #{tpu_custom_call.1} parent=11 // pred_check_branch
          %337 = sbr.rel (%p335) target = $region40
        $region39: #{tpu_custom_call.1} parent=11 // pred_region
          _
        $region40: #{tpu_custom_call.1} parent=11 // pred_fallthru
          _
        // Predicated region
        $region41: #{tpu_custom_call.1} parent=11 // pred_check
          %p338 = pneg %p218
        $region42: #{tpu_custom_call.1} parent=11 // pred_check_branch
          %340 = sbr.rel (%p338) target = $region44
        $region43: #{tpu_custom_call.1} parent=11 // pred_region
          _
        $region44: #{tpu_custom_call.1} parent=11 // pred_fallthru
          _
        // Predicated region
        $region45: #{tpu_custom_call.1} parent=11 // pred_check
          %p341 = pneg %p239
        $region46: #{tpu_custom_call.1} parent=11 // pred_check_branch
          %343 = sbr.rel (%p341) target = $region48
        $region47: #{tpu_custom_call.1} parent=11 // pred_region
          _
        $region48: #{tpu_custom_call.1} parent=11 // pred_fallthru
          _
        // Predicated region
        $region49: #{tpu_custom_call.1} parent=11 // pred_check
          %p344 = pneg %p260
        $region50: #{tpu_custom_call.1} parent=11 // pred_check_branch
          %346 = sbr.rel (%p344) target = $region52
        $region51: #{tpu_custom_call.1} parent=11 // pred_region
          _
        $region52: #{tpu_custom_call.1} parent=11 // pred_fallthru
          _
      $region12: #{tpu_custom_call.1} parent=5 // pred_fallthru
        _
      %p347 = scmp.lt.s32.totalorder %s24, 2
      // Predicated region
      $region53: #{tpu_custom_call.1} parent=5 // pred_check
        %p348 = pneg %p347
      $region54: #{tpu_custom_call.1} parent=5 // pred_check_branch
        %350 = sbr.rel (%p348) target = $region56
      $region55: #{tpu_custom_call.1} parent=5 // pred_region
        // Predicated region
        $region57: #{tpu_custom_call.1} parent=55 // pred_check
          %p351 = pneg %p44
        $region58: #{tpu_custom_call.1} parent=55 // pred_check_branch
          %353 = sbr.rel (%p351) target = $region60
        $region59: #{tpu_custom_call.1} parent=55 // pred_region
          %s354 = sand.u32 %s34, 1
          %s355 = scalar_lea.sflag [#allocation3], %s354
          %s356 = sand.u32 %s34, 1
          %s357 = smul.addr %s356, 4
          %s358 = scalar_lea.vmem [#allocation2], %s357
          %s360 = ssub.s32 64, 64
          %361 = vsyncadd %s355, %s360
          %s362 = smul.addr %s24, 64
          %s363 = scalar_lea.hbm %s0, %s362
          %s365 = sshll.u32 %s358, 4
          %s366 = int_to_ptr.vmem [resolvable:$true] %s365
          %368 = dma.hbm_to_vmem [thread:$0]  %s363, 64, %s366, %s355
        $region60: #{tpu_custom_call.1} parent=55 // pred_fallthru
          _
      $region56: #{tpu_custom_call.1} parent=5 // pred_fallthru
        _
      %p369 = scmp.le.s32.totalorder 1, %s24
      %p370 = scmp.lt.s32.totalorder %s24, 3
      %p371 = pnand %p369, %p370
      %p372 = pneg %p371
      // Predicated region
      $region61: #{tpu_custom_call.1} parent=5 // pred_check
        _
      $region62: #{tpu_custom_call.1} parent=5 // pred_check_branch
        %374 = sbr.rel (%p371) target = $region64
      $region63: #{tpu_custom_call.1} parent=5 // pred_region
        %s375 = ssub.s32 %s24, 1
        %s376 = sand.u32 %s37, 1
        %s377 = scalar_lea.sflag [#allocation3], %s376
        %s378 = sand.u32 %s37, 1
        %s379 = smul.addr %s378, 4
        %s380 = scalar_lea.vmem [#allocation2], %s379
        // Predicated region
        $region65: #{tpu_custom_call.1} parent=63 // pred_check
          %p381 = pneg %p50
        $region66: #{tpu_custom_call.1} parent=63 // pred_check_branch
          %383 = sbr.rel (%p381) target = $region68
        $region67: #{tpu_custom_call.1} parent=63 // pred_region
          %384 = dma.done %s377, 64
        $region68: #{tpu_custom_call.1} parent=63 // pred_fallthru
          _
        // Predicated region
        $region69: #{tpu_custom_call.1} parent=63 // pred_check
          %p385 = pneg %p92
        $region70: #{tpu_custom_call.1} parent=63 // pred_check_branch
          %387 = sbr.rel (%p385) target = $region72
        $region71: #{tpu_custom_call.1} parent=63 // pred_region
          %388 = dma.done [#allocation6], 16
        $region72: #{tpu_custom_call.1} parent=63 // pred_fallthru
          _
        // Predicated region
        $region73: #{tpu_custom_call.1} parent=63 // pred_check
          %p389 = pneg %p134
        $region74: #{tpu_custom_call.1} parent=63 // pred_check_branch
          %391 = sbr.rel (%p389) target = $region76
        $region75: #{tpu_custom_call.1} parent=63 // pred_region
          %392 = dma.done [#allocation6], 16
        $region76: #{tpu_custom_call.1} parent=63 // pred_fallthru
          _
        %s393 = sand.u32 %s37, 1
        %s394 = scalar_lea.sflag [#allocation3], %s393
        %s395 = sand.u32 %s37, 1
        %s396 = smul.addr %s395, 4
        %s397 = scalar_lea.vmem [#allocation2], %s396
        %p398 = pneg %p50
        %p399 = pneg %p47
        %p400 = pneg %p71
        %p401 = pneg %p68
        %p402 = pneg %p92
        %p403 = pneg %p89
        %p404 = pneg %p113
        %p405 = pneg %p110
        %p406 = pneg %p134
        %p407 = pneg %p131
        %p408 = pneg %p155
        %p409 = pneg %p152
        %p410 = pneg %p176
        %p411 = pneg %p173
        %p412 = pneg %p197
        %p413 = pneg %p194
        %p414 = pneg %p218
        %p415 = pneg %p215
        %p416 = pneg %p239
        %p417 = pneg %p236
        %p418 = pneg %p260
        %p419 = pneg %p257
        %p420 = pneg %p286
        %p421 = pneg %p283
        %s422 = sand.u32 %s273, 1
        %s423 = scalar_lea.sflag [#allocation4], %s422
        %s424 = sand.u32 %s273, 1
        %s425 = smul.addr %s424, 8
        %s426 = scalar_lea.vmem [#allocation8], %s425
        %v428 = vld [vmem:[%s380] sm:$0xf]
        %v429 = vld [vmem:[%s10] sm:$0xf]
        %v430 = vld [vmem:[%s1] sm:$0xf]
        %v431 = vld [vmem:[%s1 + $0x4] sm:$0xf]
        %v432 = vld [vmem:[%s1 + $0x8] sm:$0xf]
        %v433 = vld [vmem:[%s1 + $0xc] sm:$0xf]
        %v434 = vld [vmem:[#allocation5] sm:$0x1]
        %v436 = vlaneseq
        %v437 = vshrl.u32 %v436, 7
        %v438 = vsub.s32 0, %v437
        %v439 = vrot.slane %v434, %v438
        %v445 = vunpack.c.l.b16 %v430
        %v446 = vunpack.c.l.b16 %v431
        %v447 = vunpack.c.l.b16 %v432
        %v448 = vunpack.c.l.b16 %v433
        %v449 = vpack.c.b16 %v446, %v445
        %v450 = vpack.c.b16 %v448, %v447
        %vm453 = vcmask 261120
        %v455 = vsel %vm453, %v428, 0
        %457 = vmatprep.subr.bf16.mxu0 0
        %458 = vmatpush1.bf16.msra.mxu0 %v449
        %459 = vmatprep.subr.bf16.mxu0 0
        %460 = vmatpush1.bf16.msra.mxu0 %v450
        %461 = vmatprep.subr.bf16.mxu0 0
        %462 = vmatpush1.bf16.msra.mxu0 0
        %463 = vmatprep.subr.bf16.mxu0 0
        %464 = vmatpush1.bf16.msra.mxu0 0
        %465 = vmatprep.subr.bf16.mxu0 0
        %466 = vmatpush1.bf16.msra.mxu0 0
        %467 = vmatprep.subr.bf16.mxu0 0
        %468 = vmatpush1.bf16.msra.mxu0 0
        %469 = vmatprep.subr.bf16.mxu0 0
        %470 = vmatpush1.bf16.msra.mxu0 0
        %471 = vmatprep.subr.bf16.mxu0 0
        %472 = vmatpush1.bf16.msra.mxu0 0
        %473 = vmatprep.subr.bf16.mxu0 0
        %474 = vmatpush1.bf16.msra.mxu0 0
        %475 = vmatprep.subr.bf16.mxu0 0
        %476 = vmatpush1.bf16.msra.mxu0 0
        %477 = vmatprep.subr.bf16.mxu0 0
        %478 = vmatpush1.bf16.msra.mxu0 0
        %479 = vmatprep.subr.bf16.mxu0 0
        %480 = vmatpush1.bf16.msra.mxu0 0
        %481 = vmatprep.subr.bf16.mxu0 0
        %482 = vmatpush1.bf16.msra.mxu0 0
        %483 = vmatprep.subr.bf16.mxu0 0
        %484 = vmatpush1.bf16.msra.mxu0 0
        %485 = vmatprep.subr.bf16.mxu0 0
        %486 = vmatpush1.bf16.msra.mxu0 0
        %487 = vmatprep.subr.bf16.mxu0 0
        %488 = vmatpush1.bf16.msra.mxu0 0
        %489 = vmatprep.mubr.bf16.mxu0 0
        %490 = vmatmul.mubr.bf16.gmra.mrb[0].mxu0 %v455
        %v491 = vpop.f32.mrb[0].mxu0
        %v492 = vadd.f32 %v439, %v491
        %v493 = vpop.f32.mrb[0].mxu0
        %v494 = vpop.f32.mrb[0].mxu0
        %v495 = vpop.f32.mrb[0].mxu0
        %496 = vdwg.mxu0
        %v497 = vld [vmem:[%s3] sm:$0xf]
        %v498 = vld [vmem:[%s3 + $0x4] sm:$0xf]
        %v499 = vld [vmem:[%s3 + $0x8] sm:$0xf]
        %v500 = vld [vmem:[%s3 + $0xc] sm:$0xf]
        %v501 = vld [vmem:[#allocation7] sm:$0x1]
        %v503 = vlaneseq
        %v504 = vshrl.u32 %v503, 7
        %v505 = vsub.s32 0, %v504
        %v506 = vrot.slane %v501, %v505
        %v512 = vunpack.c.l.b16 %v497
        %v513 = vunpack.c.l.b16 %v498
        %v514 = vunpack.c.l.b16 %v499
        %v515 = vunpack.c.l.b16 %v500
        %v516 = vpack.c.b16 %v513, %v512
        %v517 = vpack.c.b16 %v515, %v514
        %520 = vmatprep.subr.bf16.mxu0 0
        %521 = vmatpush1.bf16.msra.mxu0 %v516
        %522 = vmatprep.subr.bf16.mxu0 0
        %523 = vmatpush1.bf16.msra.mxu0 %v517
        %524 = vmatprep.subr.bf16.mxu0 0
        %525 = vmatpush1.bf16.msra.mxu0 0
        %526 = vmatprep.subr.bf16.mxu0 0
        %527 = vmatpush1.bf16.msra.mxu0 0
        %528 = vmatprep.subr.bf16.mxu0 0
        %529 = vmatpush1.bf16.msra.mxu0 0
        %530 = vmatprep.subr.bf16.mxu0 0
        %531 = vmatpush1.bf16.msra.mxu0 0
        %532 = vmatprep.subr.bf16.mxu0 0
        %533 = vmatpush1.bf16.msra.mxu0 0
        %534 = vmatprep.subr.bf16.mxu0 0
        %535 = vmatpush1.bf16.msra.mxu0 0
        %536 = vmatprep.subr.bf16.mxu0 0
        %537 = vmatpush1.bf16.msra.mxu0 0
        %538 = vmatprep.subr.bf16.mxu0 0
        %539 = vmatpush1.bf16.msra.mxu0 0
        %540 = vmatprep.subr.bf16.mxu0 0
        %541 = vmatpush1.bf16.msra.mxu0 0
        %542 = vmatprep.subr.bf16.mxu0 0
        %543 = vmatpush1.bf16.msra.mxu0 0
        %544 = vmatprep.subr.bf16.mxu0 0
        %545 = vmatpush1.bf16.msra.mxu0 0
        %546 = vmatprep.subr.bf16.mxu0 0
        %547 = vmatpush1.bf16.msra.mxu0 0
        %548 = vmatprep.subr.bf16.mxu0 0
        %549 = vmatpush1.bf16.msra.mxu0 0
        %550 = vmatprep.subr.bf16.mxu0 0
        %551 = vmatpush1.bf16.msra.mxu0 0
        %552 = vmatprep.mubr.bf16.mxu0 0
        %553 = vmatmul.mubr.bf16.gmra.mrb[0].mxu0 %v455
        %v554 = vpop.f32.mrb[0].mxu0
        %v555 = vadd.f32 %v506, %v554
        %v556 = vpop.f32.mrb[0].mxu0
        %v557 = vpop.f32.mrb[0].mxu0
        %v558 = vpop.f32.mrb[0].mxu0
        %559 = vdwg.mxu0
        %v560 = vpack.c.bf16 %v492, %v492
        %v561 = vpack.c.bf16 %v555, %v555
        %v562 = vld [vmem:[%s5] sm:$0xf]
        %v563 = vld [vmem:[%s5 + $0x4] sm:$0xf]
        %v564 = vld [vmem:[%s5 + $0x8] sm:$0xf]
        %v565 = vld [vmem:[%s5 + $0xc] sm:$0xf]
        %v566 = vld [vmem:[%s6] sm:$0x1]
        %v568 = vlaneseq
        %v569 = vshrl.u32 %v568, 7
        %v570 = vsub.s32 0, %v569
        %v571 = vrot.slane %v566, %v570
        %v577 = vunpack.c.l.b16 %v562
        %v578 = vunpack.c.l.b16 %v563
        %v579 = vunpack.c.l.b16 %v564
        %v580 = vunpack.c.l.b16 %v565
        %v581 = vpack.c.b16 %v578, %v577
        %v582 = vpack.c.b16 %v580, %v579
        %v586 = vsel %vm453, %v560, 0
        %588 = vmatprep.subr.bf16.mxu0 0
        %589 = vmatpush1.bf16.msra.mxu0 %v581
        %590 = vmatprep.subr.bf16.mxu0 0
        %591 = vmatpush1.bf16.msra.mxu0 %v582
        %592 = vmatprep.subr.bf16.mxu0 0
        %593 = vmatpush1.bf16.msra.mxu0 0
        %594 = vmatprep.subr.bf16.mxu0 0
        %595 = vmatpush1.bf16.msra.mxu0 0
        %596 = vmatprep.subr.bf16.mxu0 0
        %597 = vmatpush1.bf16.msra.mxu0 0
        %598 = vmatprep.subr.bf16.mxu0 0
        %599 = vmatpush1.bf16.msra.mxu0 0
        %600 = vmatprep.subr.bf16.mxu0 0
        %601 = vmatpush1.bf16.msra.mxu0 0
        %602 = vmatprep.subr.bf16.mxu0 0
        %603 = vmatpush1.bf16.msra.mxu0 0
        %604 = vmatprep.subr.bf16.mxu0 0
        %605 = vmatpush1.bf16.msra.mxu0 0
        %606 = vmatprep.subr.bf16.mxu0 0
        %607 = vmatpush1.bf16.msra.mxu0 0
        %608 = vmatprep.subr.bf16.mxu0 0
        %609 = vmatpush1.bf16.msra.mxu0 0
        %610 = vmatprep.subr.bf16.mxu0 0
        %611 = vmatpush1.bf16.msra.mxu0 0
        %612 = vmatprep.subr.bf16.mxu0 0
        %613 = vmatpush1.bf16.msra.mxu0 0
        %614 = vmatprep.subr.bf16.mxu0 0
        %615 = vmatpush1.bf16.msra.mxu0 0
        %616 = vmatprep.subr.bf16.mxu0 0
        %617 = vmatpush1.bf16.msra.mxu0 0
        %618 = vmatprep.subr.bf16.mxu0 0
        %619 = vmatpush1.bf16.msra.mxu0 0
        %620 = vmatprep.mubr.bf16.mxu0 0
        %621 = vmatmul.mubr.bf16.gmra.mrb[0].mxu0 %v586
        %v622 = vpop.f32.mrb[0].mxu0
        %v623 = vadd.f32 %v571, %v622
        %v624 = vpop.f32.mrb[0].mxu0
        %v625 = vpop.f32.mrb[0].mxu0
        %v626 = vpop.f32.mrb[0].mxu0
        %627 = vdwg.mxu0
        %vm628 = vcmask 31744
        %v629 = vsel %vm628, %v623, -inf
        %v630 = vrot.slane %v629, 4
        %v631 = vmax.f32 %v629, %v630
        %v632 = vrot.slane %v631, 2
        %v633 = vmax.f32 %v631, %v632
        %v634 = vrot.slane %v633, 1
        %v635 = vmax.f32 %v633, %v634
        %v636 = vsub.f32 %v623, %v635
        %v637 = vmul.f32 %v636, 1.442695
        %v638 = vpow.pop %v637
        %v639 = vsel %vm628, %v638, 0.0
        %v640 = vrot.slane %v639, 4
        %v641 = vadd.f32 %v639, %v640
        %v642 = vrot.slane %v641, 2
        %v643 = vadd.f32 %v641, %v642
        %v644 = vrot.slane %v643, 1
        %v645 = vadd.f32 %v643, %v644
        %v646 = vrcp.pop %v645
        %v647 = vpack.c.bf16 %v638, %v638
        %648 = vxpose.xlu0.c.b16.start [1/8] %v647, 128
        %649 = vxpose.xlu0.c.b16.cont [2/8] 0, 128
        %650 = vxpose.xlu0.c.b16.cont [3/8] 0, 128
        %651 = vxpose.xlu0.c.b16.cont [4/8] 0, 128
        %652 = vxpose.xlu0.c.b16.cont [5/8] 0, 128
        %653 = vxpose.xlu0.c.b16.cont [6/8] 0, 128
        %654 = vxpose.xlu0.c.b16.cont [7/8] 0, 128
        %655 = vxpose.xlu0.c.b16.end [8/8] 0, 128
        %v656 = vpop.trf.xlu0
        %v657 = vpop.trf.xlu0
        %v658 = vpop.trf.xlu0
        %v659 = vpop.trf.xlu0
        %v660 = vpop.trf.xlu0
        %v661 = vpop.trf.xlu0
        %v662 = vpop.trf.xlu0
        %v663 = vpop.trf.xlu0
        %vm664 = vcmask 64512
        %v666 = vsel %vm664, %v656, 0
        %vm668 = vcmask 1043456
        %v669 = vsel %vm668, %v560, 0
        %671 = vmatprep.subr.bf16.mxu0 0
        %672 = vmatpush1.bf16.msra.mxu0 %v669
        %673 = vmatprep.subr.bf16.mxu0 0
        %674 = vmatpush1.bf16.msra.mxu0 0
        %675 = vmatprep.subr.bf16.mxu0 0
        %676 = vmatpush1.bf16.msra.mxu0 0
        %677 = vmatprep.subr.bf16.mxu0 0
        %678 = vmatpush1.bf16.msra.mxu0 0
        %679 = vmatprep.subr.bf16.mxu0 0
        %680 = vmatpush1.bf16.msra.mxu0 0
        %681 = vmatprep.subr.bf16.mxu0 0
        %682 = vmatpush1.bf16.msra.mxu0 0
        %683 = vmatprep.subr.bf16.mxu0 0
        %684 = vmatpush1.bf16.msra.mxu0 0
        %685 = vmatprep.subr.bf16.mxu0 0
        %686 = vmatpush1.bf16.msra.mxu0 0
        %687 = vmatprep.subr.bf16.mxu0 0
        %688 = vmatpush1.bf16.msra.mxu0 0
        %689 = vmatprep.subr.bf16.mxu0 0
        %690 = vmatpush1.bf16.msra.mxu0 0
        %691 = vmatprep.subr.bf16.mxu0 0
        %692 = vmatpush1.bf16.msra.mxu0 0
        %693 = vmatprep.subr.bf16.mxu0 0
        %694 = vmatpush1.bf16.msra.mxu0 0
        %695 = vmatprep.subr.bf16.mxu0 0
        %696 = vmatpush1.bf16.msra.mxu0 0
        %697 = vmatprep.subr.bf16.mxu0 0
        %698 = vmatpush1.bf16.msra.mxu0 0
        %699 = vmatprep.subr.bf16.mxu0 0
        %700 = vmatpush1.bf16.msra.mxu0 0
        %701 = vmatprep.subr.bf16.mxu0 0
        %702 = vmatpush1.bf16.msra.mxu0 0
        %703 = vmatprep.mubr.bf16.mxu0 0
        %704 = vmatmul.mubr.bf16.gmra.mrb[0].mxu0 %v666
        %v705 = vpop.f32.mrb[0].mxu0
        %v706 = vadd.f32 0.0, %v705
        %v707 = vpop.f32.mrb[0].mxu0
        %v708 = vpop.f32.mrb[0].mxu0
        %v709 = vpop.f32.mrb[0].mxu0
        %710 = vdwg.mxu0
        %v712 = vsel %vm628, %v646, 0
        %v715 = vsel %vm668, %v429, 0
        %717 = vmatprep.subr.mxu0 0.0
        %718 = vmatpush1.msra.mxu0 %v715
        %719 = vmatprep.subr.mxu0 0.0
        %720 = vmatpush1.msra.mxu0 0.0
        %721 = vmatprep.subr.mxu0 0.0
        %722 = vmatpush1.msra.mxu0 0.0
        %723 = vmatprep.subr.mxu0 0.0
        %724 = vmatpush1.msra.mxu0 0.0
        %725 = vmatprep.subr.mxu0 0.0
        %726 = vmatpush1.msra.mxu0 0.0
        %727 = vmatprep.subr.mxu0 0.0
        %728 = vmatpush1.msra.mxu0 0.0
        %729 = vmatprep.subr.mxu0 0.0
        %730 = vmatpush1.msra.mxu0 0.0
        %731 = vmatprep.subr.mxu0 0.0
        %732 = vmatpush1.msra.mxu0 0.0
        %733 = vmatprep.subr.mxu0 0.0
        %734 = vmatpush1.msra.mxu0 0.0
        %735 = vmatprep.subr.mxu0 0.0
        %736 = vmatpush1.msra.mxu0 0.0
        %737 = vmatprep.subr.mxu0 0.0
        %738 = vmatpush1.msra.mxu0 0.0
        %739 = vmatprep.subr.mxu0 0.0
        %740 = vmatpush1.msra.mxu0 0.0
        %741 = vmatprep.subr.mxu0 0.0
        %742 = vmatpush1.msra.mxu0 0.0
        %743 = vmatprep.subr.mxu0 0.0
        %744 = vmatpush1.msra.mxu0 0.0
        %745 = vmatprep.subr.mxu0 0.0
        %746 = vmatpush1.msra.mxu0 0.0
        %747 = vmatprep.subr.mxu0 0.0
        %748 = vmatpush1.msra.mxu0 0.0
        %749 = vmatprep.subr.mxu0 0.0
        %750 = vmatpush1.msra.mxu0 0.0
        %751 = vmatprep.subr.mxu0 0.0
        %752 = vmatpush1.msra.mxu0 0.0
        %753 = vmatprep.subr.mxu0 0.0
        %754 = vmatpush1.msra.mxu0 0.0
        %755 = vmatprep.subr.mxu0 0.0
        %756 = vmatpush1.msra.mxu0 0.0
        %757 = vmatprep.subr.mxu0 0.0
        %758 = vmatpush1.msra.mxu0 0.0
        %759 = vmatprep.subr.mxu0 0.0
        %760 = vmatpush1.msra.mxu0 0.0
        %761 = vmatprep.subr.mxu0 0.0
        %762 = vmatpush1.msra.mxu0 0.0
        %763 = vmatprep.subr.mxu0 0.0
        %764 = vmatpush1.msra.mxu0 0.0
        %765 = vmatprep.subr.mxu0 0.0
        %766 = vmatpush1.msra.mxu0 0.0
        %767 = vmatprep.subr.mxu0 0.0
        %768 = vmatpush1.msra.mxu0 0.0
        %769 = vmatprep.subr.mxu0 0.0
        %770 = vmatpush1.msra.mxu0 0.0
        %771 = vmatprep.subr.mxu0 0.0
        %772 = vmatpush1.msra.mxu0 0.0
        %773 = vmatprep.subr.mxu0 0.0
        %774 = vmatpush1.msra.mxu0 0.0
        %775 = vmatprep.subr.mxu0 0.0
        %776 = vmatpush1.msra.mxu0 0.0
        %777 = vmatprep.subr.mxu0 0.0
        %778 = vmatpush1.msra.mxu0 0.0
        %779 = vmatprep.subr.mxu0 0.0
        %780 = vmatpush1.msra.mxu0 0.0
        %781 = vmatprep.mubr.f32.mxu0 0.0
        %782 = vmatmul.mubr.f32.gmra.mrb[0].mxu0 %v712
        %v783 = vpop.f32.mrb[0].mxu0
        %v784 = vadd.f32 0.0, %v783
        %v785 = vpop.f32.mrb[0].mxu0
        %786 = vdwg.mxu0
        %v787 = vmul.f32 %v706, %v429
        %vm788 = vcmask 257024
        %v789 = vsel %vm788, %v787, 0.0
        %v790 = vrot.slane %v789, 4
        %v791 = vadd.f32 %v789, %v790
        %v792 = vrot.slane %v791, 2
        %v793 = vadd.f32 %v791, %v792
        %v794 = vrot.slane %v793, 1
        %v795 = vadd.f32 %v793, %v794
        %v796 = vmul.f32 %v795, %v784
        %v797 = vmul.f32 %v796, 0.35355338
        %v798 = vlaneseq
        %v799 = vshrl.u32 %v798, 7
        %v800 = vsub.s32 0, %v799
        %v801 = vrot.slane %v797, %v800
        %v802 = vmul.f32 %v555, %v801
        %v803 = vpack.c.bf16 %v802, %v802
        %v804 = vld [vmem:[%s9] sm:$0xf]
        %v805 = vld [vmem:[%s9 + $0x4] sm:$0xf]
        %v806 = vld [vmem:[%s9 + $0x8] sm:$0xf]
        %v807 = vld [vmem:[%s9 + $0xc] sm:$0xf]
        %v812 = vunpack.c.l.b16 %v804
        %v813 = vunpack.c.l.b16 %v805
        %v814 = vunpack.c.l.b16 %v806
        %v815 = vunpack.c.l.b16 %v807
        %v816 = vpack.c.b16 %v813, %v812
        %v817 = vpack.c.b16 %v815, %v814
        %v821 = vsel %vm453, %v803, 0
        %823 = vmatprep.subr.bf16.mxu0 0
        %824 = vmatpush1.bf16.msra.mxu0 %v816
        %825 = vmatprep.subr.bf16.mxu0 0
        %826 = vmatpush1.bf16.msra.mxu0 %v817
        %827 = vmatprep.subr.bf16.mxu0 0
        %828 = vmatpush1.bf16.msra.mxu0 0
        %829 = vmatprep.subr.bf16.mxu0 0
        %830 = vmatpush1.bf16.msra.mxu0 0
        %831 = vmatprep.subr.bf16.mxu0 0
        %832 = vmatpush1.bf16.msra.mxu0 0
        %833 = vmatprep.subr.bf16.mxu0 0
        %834 = vmatpush1.bf16.msra.mxu0 0
        %835 = vmatprep.subr.bf16.mxu0 0
        %836 = vmatpush1.bf16.msra.mxu0 0
        %837 = vmatprep.subr.bf16.mxu0 0
        %838 = vmatpush1.bf16.msra.mxu0 0
        %839 = vmatprep.subr.bf16.mxu0 0
        %840 = vmatpush1.bf16.msra.mxu0 0
        %841 = vmatprep.subr.bf16.mxu0 0
        %842 = vmatpush1.bf16.msra.mxu0 0
        %843 = vmatprep.subr.bf16.mxu0 0
        %844 = vmatpush1.bf16.msra.mxu0 0
        %845 = vmatprep.subr.bf16.mxu0 0
        %846 = vmatpush1.bf16.msra.mxu0 0
        %847 = vmatprep.subr.bf16.mxu0 0
        %848 = vmatpush1.bf16.msra.mxu0 0
        %849 = vmatprep.subr.bf16.mxu0 0
        %850 = vmatpush1.bf16.msra.mxu0 0
        %851 = vmatprep.subr.bf16.mxu0 0
        %852 = vmatpush1.bf16.msra.mxu0 0
        %853 = vmatprep.subr.bf16.mxu0 0
        %854 = vmatpush1.bf16.msra.mxu0 0
        %855 = vmatprep.mubr.bf16.mxu0 0
        %856 = vmatmul.mubr.bf16.gmra.mrb[0].mxu0 %v821
        %v857 = vpop.f32.mrb[0].mxu0
        %v858 = vadd.f32 0.0, %v857
        %v859 = vpop.f32.mrb[0].mxu0
        %v860 = vpop.f32.mrb[0].mxu0
        %v861 = vpop.f32.mrb[0].mxu0
        %862 = vdwg.mxu0
        %v863 = vsel %vm628, %v858, -inf
        %v864 = vrot.slane %v863, 4
        %v865 = vmax.f32 %v863, %v864
        %v866 = vrot.slane %v865, 2
        %v867 = vmax.f32 %v865, %v866
        %v868 = vrot.slane %v867, 1
        %v869 = vmax.f32 %v867, %v868
        %v870 = vsub.f32 %v858, %v869
        %v871 = vmul.f32 %v870, 1.442695
        %v872 = vpow.pop %v871
        %v873 = vsel %vm628, %v872, 0.0
        %v874 = vrot.slane %v873, 4
        %v875 = vadd.f32 %v873, %v874
        %v876 = vrot.slane %v875, 2
        %v877 = vadd.f32 %v875, %v876
        %v878 = vrot.slane %v877, 1
        %v879 = vadd.f32 %v877, %v878
        %v880 = vrcp.pop %v879
        %v881 = vpack.c.bf16 %v872, %v872
        %882 = vxpose.xlu0.c.b16.start [1/8] %v881, 128
        %883 = vxpose.xlu0.c.b16.cont [2/8] 0, 128
        %884 = vxpose.xlu0.c.b16.cont [3/8] 0, 128
        %885 = vxpose.xlu0.c.b16.cont [4/8] 0, 128
        %886 = vxpose.xlu0.c.b16.cont [5/8] 0, 128
        %887 = vxpose.xlu0.c.b16.cont [6/8] 0, 128
        %888 = vxpose.xlu0.c.b16.cont [7/8] 0, 128
        %889 = vxpose.xlu0.c.b16.end [8/8] 0, 128
        %v890 = vpop.trf.xlu0
        %v891 = vpop.trf.xlu0
        %v892 = vpop.trf.xlu0
        %v893 = vpop.trf.xlu0
        %v894 = vpop.trf.xlu0
        %v895 = vpop.trf.xlu0
        %v896 = vpop.trf.xlu0
        %v897 = vpop.trf.xlu0
        %v899 = vsel %vm664, %v890, 0
        %v902 = vsel %vm668, %v561, 0
        %904 = vmatprep.subr.bf16.mxu0 0
        %905 = vmatpush1.bf16.msra.mxu0 %v902
        %906 = vmatprep.subr.bf16.mxu0 0
        %907 = vmatpush1.bf16.msra.mxu0 0
        %908 = vmatprep.subr.bf16.mxu0 0
        %909 = vmatpush1.bf16.msra.mxu0 0
        %910 = vmatprep.subr.bf16.mxu0 0
        %911 = vmatpush1.bf16.msra.mxu0 0
        %912 = vmatprep.subr.bf16.mxu0 0
        %913 = vmatpush1.bf16.msra.mxu0 0
        %914 = vmatprep.subr.bf16.mxu0 0
        %915 = vmatpush1.bf16.msra.mxu0 0
        %916 = vmatprep.subr.bf16.mxu0 0
        %917 = vmatpush1.bf16.msra.mxu0 0
        %918 = vmatprep.subr.bf16.mxu0 0
        %919 = vmatpush1.bf16.msra.mxu0 0
        %920 = vmatprep.subr.bf16.mxu0 0
        %921 = vmatpush1.bf16.msra.mxu0 0
        %922 = vmatprep.subr.bf16.mxu0 0
        %923 = vmatpush1.bf16.msra.mxu0 0
        %924 = vmatprep.subr.bf16.mxu0 0
        %925 = vmatpush1.bf16.msra.mxu0 0
        %926 = vmatprep.subr.bf16.mxu0 0
        %927 = vmatpush1.bf16.msra.mxu0 0
        %928 = vmatprep.subr.bf16.mxu0 0
        %929 = vmatpush1.bf16.msra.mxu0 0
        %930 = vmatprep.subr.bf16.mxu0 0
        %931 = vmatpush1.bf16.msra.mxu0 0
        %932 = vmatprep.subr.bf16.mxu0 0
        %933 = vmatpush1.bf16.msra.mxu0 0
        %934 = vmatprep.subr.bf16.mxu0 0
        %935 = vmatpush1.bf16.msra.mxu0 0
        %936 = vmatprep.mubr.bf16.mxu0 0
        %937 = vmatmul.mubr.bf16.gmra.mrb[0].mxu0 %v899
        %v938 = vpop.f32.mrb[0].mxu0
        %v939 = vadd.f32 0.0, %v938
        %v940 = vpop.f32.mrb[0].mxu0
        %v941 = vpop.f32.mrb[0].mxu0
        %v942 = vpop.f32.mrb[0].mxu0
        %943 = vdwg.mxu0
        %v945 = vsel %vm628, %v880, 0
        %947 = vmatprep.subr.mxu0 0.0
        %948 = vmatpush1.msra.mxu0 %v715
        %949 = vmatprep.subr.mxu0 0.0
        %950 = vmatpush1.msra.mxu0 0.0
        %951 = vmatprep.subr.mxu0 0.0
        %952 = vmatpush1.msra.mxu0 0.0
        %953 = vmatprep.subr.mxu0 0.0
        %954 = vmatpush1.msra.mxu0 0.0
        %955 = vmatprep.subr.mxu0 0.0
        %956 = vmatpush1.msra.mxu0 0.0
        %957 = vmatprep.subr.mxu0 0.0
        %958 = vmatpush1.msra.mxu0 0.0
        %959 = vmatprep.subr.mxu0 0.0
        %960 = vmatpush1.msra.mxu0 0.0
        %961 = vmatprep.subr.mxu0 0.0
        %962 = vmatpush1.msra.mxu0 0.0
        %963 = vmatprep.subr.mxu0 0.0
        %964 = vmatpush1.msra.mxu0 0.0
        %965 = vmatprep.subr.mxu0 0.0
        %966 = vmatpush1.msra.mxu0 0.0
        %967 = vmatprep.subr.mxu0 0.0
        %968 = vmatpush1.msra.mxu0 0.0
        %969 = vmatprep.subr.mxu0 0.0
        %970 = vmatpush1.msra.mxu0 0.0
        %971 = vmatprep.subr.mxu0 0.0
        %972 = vmatpush1.msra.mxu0 0.0
        %973 = vmatprep.subr.mxu0 0.0
        %974 = vmatpush1.msra.mxu0 0.0
        %975 = vmatprep.subr.mxu0 0.0
        %976 = vmatpush1.msra.mxu0 0.0
        %977 = vmatprep.subr.mxu0 0.0
        %978 = vmatpush1.msra.mxu0 0.0
        %979 = vmatprep.subr.mxu0 0.0
        %980 = vmatpush1.msra.mxu0 0.0
        %981 = vmatprep.subr.mxu0 0.0
        %982 = vmatpush1.msra.mxu0 0.0
        %983 = vmatprep.subr.mxu0 0.0
        %984 = vmatpush1.msra.mxu0 0.0
        %985 = vmatprep.subr.mxu0 0.0
        %986 = vmatpush1.msra.mxu0 0.0
        %987 = vmatprep.subr.mxu0 0.0
        %988 = vmatpush1.msra.mxu0 0.0
        %989 = vmatprep.subr.mxu0 0.0
        %990 = vmatpush1.msra.mxu0 0.0
        %991 = vmatprep.subr.mxu0 0.0
        %992 = vmatpush1.msra.mxu0 0.0
        %993 = vmatprep.subr.mxu0 0.0
        %994 = vmatpush1.msra.mxu0 0.0
        %995 = vmatprep.subr.mxu0 0.0
        %996 = vmatpush1.msra.mxu0 0.0
        %997 = vmatprep.subr.mxu0 0.0
        %998 = vmatpush1.msra.mxu0 0.0
        %999 = vmatprep.subr.mxu0 0.0
        %1000 = vmatpush1.msra.mxu0 0.0
        %1001 = vmatprep.subr.mxu0 0.0
        %1002 = vmatpush1.msra.mxu0 0.0
        %1003 = vmatprep.subr.mxu0 0.0
        %1004 = vmatpush1.msra.mxu0 0.0
        %1005 = vmatprep.subr.mxu0 0.0
        %1006 = vmatpush1.msra.mxu0 0.0
        %1007 = vmatprep.subr.mxu0 0.0
        %1008 = vmatpush1.msra.mxu0 0.0
        %1009 = vmatprep.subr.mxu0 0.0
        %1010 = vmatpush1.msra.mxu0 0.0
        %1011 = vmatprep.mubr.f32.mxu0 0.0
        %1012 = vmatmul.mubr.f32.gmra.mrb[0].mxu0 %v945
        %v1013 = vpop.f32.mrb[0].mxu0
        %v1014 = vadd.f32 0.0, %v1013
        %v1015 = vpop.f32.mrb[0].mxu0
        %1016 = vdwg.mxu0
        %v1017 = vmul.f32 %v939, %v429
        %v1018 = vsel %vm788, %v1017, 0.0
        %v1019 = vrot.slane %v1018, 4
        %v1020 = vadd.f32 %v1018, %v1019
        %v1021 = vrot.slane %v1020, 2
        %v1022 = vadd.f32 %v1020, %v1021
        %v1023 = vrot.slane %v1022, 1
        %v1024 = vadd.f32 %v1022, %v1023
        %v1025 = vmul.f32 %v1024, %v1014
        %v1026 = vlaneseq
        %v1027 = vshrl.u32 %v1026, 7
        %v1028 = vsub.s32 0, %v1027
        %v1029 = vrot.slane %v1025, %v1028
        %v1030 = vmul.f32 %v1029, %v492
        %v1031 = vpack.c.bf16 %v1030, %v1030
        %v1032 = vld [vmem:[%s7] sm:$0xf]
        %v1033 = vld [vmem:[%s7 + $0x4] sm:$0xf]
        %v1034 = vld [vmem:[%s7 + $0x8] sm:$0xf]
        %v1035 = vld [vmem:[%s7 + $0xc] sm:$0xf]
        %v1036 = vld [vmem:[%s8] sm:$0x1]
        %v1038 = vlaneseq
        %v1039 = vshrl.u32 %v1038, 7
        %v1040 = vsub.s32 0, %v1039
        %v1041 = vrot.slane %v1036, %v1040
        %v1047 = vunpack.c.l.b16 %v1032
        %v1048 = vunpack.c.l.b16 %v1033
        %v1049 = vunpack.c.l.b16 %v1034
        %v1050 = vunpack.c.l.b16 %v1035
        %v1051 = vpack.c.b16 %v1048, %v1047
        %v1052 = vpack.c.b16 %v1050, %v1049
        %v1056 = vsel %vm453, %v1031, 0
        %1058 = vmatprep.subr.bf16.mxu0 0
        %1059 = vmatpush1.bf16.msra.mxu0 %v1051
        %1060 = vmatprep.subr.bf16.mxu0 0
        %1061 = vmatpush1.bf16.msra.mxu0 %v1052
        %1062 = vmatprep.subr.bf16.mxu0 0
        %1063 = vmatpush1.bf16.msra.mxu0 0
        %1064 = vmatprep.subr.bf16.mxu0 0
        %1065 = vmatpush1.bf16.msra.mxu0 0
        %1066 = vmatprep.subr.bf16.mxu0 0
        %1067 = vmatpush1.bf16.msra.mxu0 0
        %1068 = vmatprep.subr.bf16.mxu0 0
        %1069 = vmatpush1.bf16.msra.mxu0 0
        %1070 = vmatprep.subr.bf16.mxu0 0
        %1071 = vmatpush1.bf16.msra.mxu0 0
        %1072 = vmatprep.subr.bf16.mxu0 0
        %1073 = vmatpush1.bf16.msra.mxu0 0
        %1074 = vmatprep.subr.bf16.mxu0 0
        %1075 = vmatpush1.bf16.msra.mxu0 0
        %1076 = vmatprep.subr.bf16.mxu0 0
        %1077 = vmatpush1.bf16.msra.mxu0 0
        %1078 = vmatprep.subr.bf16.mxu0 0
        %1079 = vmatpush1.bf16.msra.mxu0 0
        %1080 = vmatprep.subr.bf16.mxu0 0
        %1081 = vmatpush1.bf16.msra.mxu0 0
        %1082 = vmatprep.subr.bf16.mxu0 0
        %1083 = vmatpush1.bf16.msra.mxu0 0
        %1084 = vmatprep.subr.bf16.mxu0 0
        %1085 = vmatpush1.bf16.msra.mxu0 0
        %1086 = vmatprep.subr.bf16.mxu0 0
        %1087 = vmatpush1.bf16.msra.mxu0 0
        %1088 = vmatprep.subr.bf16.mxu0 0
        %1089 = vmatpush1.bf16.msra.mxu0 0
        %1090 = vmatprep.mubr.bf16.mxu0 0
        %1091 = vmatmul.mubr.bf16.gmra.mrb[0].mxu0 %v1056
        %v1092 = vpop.f32.mrb[0].mxu0
        %v1093 = vadd.f32 %v1041, %v1092
        %v1094 = vpop.f32.mrb[0].mxu0
        %v1095 = vpop.f32.mrb[0].mxu0
        %v1096 = vpop.f32.mrb[0].mxu0
        %1097 = vdwg.mxu0
        %v1098 = vadd.f32 %v1093, %v492
        %1099 = vst.msk [vmem:[%s426] sm:$0xff] %vm453, %v1098
        %s1100 = sand.u32 %s273, 1
        %s1101 = scalar_lea.sflag [#allocation4], %s1100
        %s1102 = sand.u32 %s273, 1
        %s1103 = smul.addr %s1102, 8
        %s1104 = scalar_lea.vmem [#allocation8], %s1103
        // Predicated region
        $region77: #{tpu_custom_call.1} parent=63 // pred_check
          %p1105 = pneg %p283
        $region78: #{tpu_custom_call.1} parent=63 // pred_check_branch
          %1107 = sbr.rel (%p1105) target = $region80
        $region79: #{tpu_custom_call.1} parent=63 // pred_region
          %s1109 = ssub.s32 128, 128
          %1110 = vsyncadd %s1101, %s1109
          %s1111 = smul.addr %s29, 128
          %s1112 = scalar_lea.hbm %s11, %s1111
          %s1114 = sshll.u32 %s1104, 4
          %s1115 = int_to_ptr.vmem [resolvable:$true] %s1114
          %1117 = dma.vmem_to_hbm [thread:$0]  %s1115, 128, %s1112, %s1101
        $region80: #{tpu_custom_call.1} parent=63 // pred_fallthru
          _
      $region64: #{tpu_custom_call.1} parent=5 // pred_fallthru
        _
      %p1118 = scmp.le.s32.totalorder 2, %s24
      // Predicated region
      $region81: #{tpu_custom_call.1} parent=5 // pred_check
        %p1119 = pneg %p1118
      $region82: #{tpu_custom_call.1} parent=5 // pred_check_branch
        %1121 = sbr.rel (%p1119) target = $region84
      $region83: #{tpu_custom_call.1} parent=5 // pred_region
        %s1122 = ssub.s32 %s24, 2
        // Predicated region
        $region85: #{tpu_custom_call.1} parent=83 // pred_check
          %p1123 = pneg %p289
        $region86: #{tpu_custom_call.1} parent=83 // pred_check_branch
          %1125 = sbr.rel (%p1123) target = $region88
        $region87: #{tpu_custom_call.1} parent=83 // pred_region
          %s1126 = sand.u32 %s274, 1
          %s1127 = scalar_lea.sflag [#allocation4], %s1126
          %s1128 = sand.u32 %s274, 1
          %s1129 = smul.addr %s1128, 8
          %s1130 = scalar_lea.vmem [#allocation8], %s1129
          %1131 = dma.done %s1127, 128
        $region88: #{tpu_custom_call.1} parent=83 // pred_fallthru
          _
      $region84: #{tpu_custom_call.1} parent=5 // pred_fallthru
        _
    $region6: #{tpu_custom_call.1} parent=1 // loop_footer
      %s28 = sadd.s32 1, %s24
    $region7: #{tpu_custom_call.1} parent=1 // loop_footer_branch
      %23 = sbr.rel target = $region3
    $region8: #{tpu_custom_call.1} parent=1 // loop_exit
      _
    %1132 = vsyncpa [#allocation3], 1
    %s1133 = scalar_lea.sflag [#allocation3], 1
    %1134 = vsyncpa %s1133, 1
    %1135 = vsyncpa [#allocation6], 1
    %1136 = vsyncpa [#allocation4], 1
    %s1137 = scalar_lea.sflag [#allocation4], 1
    %1138 = vsyncpa %s1137, 1

</llo_original>
